<compile_context>
chip_gen: v6e
topology: v6e:2x2x1
jax: 0.10.0
libtpu: 0.0.40
codegen_flags: <defaults>
</compile_context>

<pallas_src>
import functools

import jax
import jax.numpy as jnp
from jax.experimental import pallas as pl
from jax.experimental.pallas import tpu as pltpu


def _default_vmem_limit_bytes():
    """Scoped-VMEM limit = 3/4 of physical VMEM (headroom for Mosaic scratch).

    v7x (64 MiB / TensorCore) -> 48 MiB;  v5e / v6e (128 MiB) -> 96 MiB.
    """
    capacity = None
    try:
        capacity = getattr(pltpu.get_tpu_info(), "vmem_capacity_bytes", None)
    except Exception:  # interpret mode / unknown device -> conservative default
        capacity = None
    if not capacity:
        capacity = 64 * 1024 * 1024  # assume the smallest (v7x) VMEM
    return (capacity * 3) // 4


def _pick_pool_tiles(N, S, H, h_bytes, vmem_limit_bytes,
                     block_b=None, block_s=None):
    """VMEM-budgeted (block_b, block_s) for the pooling kernel."""
    budget = (vmem_limit_bytes * 3) // 4  # stay well under the scoped limit

    def working_set(bb, bs):
        h_tile = bb * bs * H * h_bytes        # hidden-state tile
        m_tile = bb * bs * h_bytes            # (bb, 1, bs) mask tile
        io_tile = bb * H * 4 + bb * 4         # pooled out + inv_len
        scratch = bb * H * 4                  # f32 sum accumulator
        return 2 * (h_tile + m_tile + io_tile) + scratch  # double-buffered I/O

    # Seq tile: multiple of 128 dividing S (prefer 512), else S itself.
    if block_s is None:
        if S % 128 == 0:
            block_s = next(c for c in range(min(S, 512), 0, -128) if S % c == 0)
        else:
            block_s = S
    elif block_s != S and (S % block_s or block_s % 128):
        raise ValueError("block_s must equal S or be a multiple of 128 dividing S")

    if block_b is not None:
        if N % block_b:
            raise ValueError("block_b must divide the batch size")
        return block_b, block_s

    # Batch tile: largest divisor of N (capped at 64) fitting the budget.
    b_cands = [b for b in range(min(N, 64), 0, -1) if N % b == 0]
    block_b = next((b for b in b_cands if working_set(b, block_s) <= budget),
                   b_cands[-1])
    # Megacore slack (v7x: 2 TensorCores split the "parallel" batch axis):
    # never collapse to a single batch tile when a smaller divisor exists.
    if block_b == N and N > 1:
        smaller = [b for b in b_cands if b < N]
        if smaller:
            block_b = smaller[0]
    return block_b, block_s


# ---------------------------------------------------------------------------
# Kernel 1: masked mean pooling, tiled over (batch_tile, seq_tile).
# ---------------------------------------------------------------------------
def _masked_mean_pool_kernel(h_ref, m_ref, inv_ref, out_ref, sum_acc):
    """One (batch_tile, seq_tile) step of sum(h * mask, seq) * inv_len."""
    j = pl.program_id(1)  # seq (reduction) step -- "arbitrary" axis

    @pl.when(j == 0)
    def _init():
        sum_acc[...] = jnp.zeros_like(sum_acc)

    m = m_ref[...]  # (Bt, 1, St) lane-dense mask row, ready as MXU LHS
    h = h_ref[...]  # (Bt, St, H)

    # Masked sum over this seq tile as a batched (1, St) x (St, H) matmul on
    # the MXU with f32 accumulation (works unchanged for bf16 hidden states).
    # NOTE: pooling is HBM-bound; if bundle analysis ever shows the vmatmul
    # slot saturating after a bf16 switch, fall back to a VPU multiply +
    # sublane reduce here.
    sum_acc[...] += jnp.einsum("bks,bsh->bkh", m, h,
                               preferred_element_type=jnp.float32)

    @pl.when(j == pl.num_programs(1) - 1)
    def _finalize():
        # inv_ref = 1 / clamp(sum(mask), 1e-9), precomputed exactly in the
        # wrapper -> pooled output matches the reference bit-for-bit (no
        # approx reciprocal), and no count accumulator / XLU reduce needed.
        out_ref[...] = (sum_acc[...] * inv_ref[...]).astype(out_ref.dtype)


def masked_mean_pool(h, mask, *, block_b=None, block_s=None,
                     vmem_limit_bytes=None):
    """sum(h * mask[..., None], axis=1) / clamp(sum(mask, axis=1), min=1e-9)."""
    N, S, H = h.shape
    if vmem_limit_bytes is None:
        vmem_limit_bytes = _default_vmem_limit_bytes()
    h_bytes = jnp.dtype(h.dtype).itemsize
    block_b, block_s = _pick_pool_tiles(N, S, H, h_bytes, vmem_limit_bytes,
                                        block_b=block_b, block_s=block_s)
    grid = (N // block_b, S // block_s)

    # Per-row 1/length computed once in XLA (tiny N x S reduce), exact.
    lens = jnp.sum(mask.astype(jnp.float32), axis=1, keepdims=True)  # (N, 1)
    inv_len = (1.0 / jnp.maximum(lens, 1e-9)).reshape(N, 1, 1)

    # Mask reshaped to (N, 1, S) in the wrapper so the kernel sees a
    # lane-dense (1, St) MXU LHS (no lane->sublane relayout in the kernel).
    mask3 = mask.astype(h.dtype).reshape(N, 1, S)

    pooled = pl.pallas_call(
        _masked_mean_pool_kernel,
        out_shape=jax.ShapeDtypeStruct((N, 1, H), jnp.float32),
        grid_spec=pltpu.PrefetchScalarGridSpec(
            num_scalar_prefetch=0,
            grid=grid,
            in_specs=[
                pl.BlockSpec((block_b, block_s, H), lambda i, j: (i, j, 0)),
                pl.BlockSpec((block_b, 1, block_s), lambda i, j: (i, 0, j)),
                pl.BlockSpec((block_b, 1, 1), lambda i, j: (i, 0, 0)),
            ],
            # Output block index ignores the seq axis -> resident accumulator.
            out_specs=pl.BlockSpec((block_b, 1, H), lambda i, j: (i, 0, 0)),
            scratch_shapes=[
                pltpu.VMEM((block_b, 1, H), jnp.float32),  # masked sum
            ],
        ),
        compiler_params=pltpu.CompilerParams(
            dimension_semantics=("parallel", "arbitrary"),
            vmem_limit_bytes=vmem_limit_bytes,
        ),
    )(h, mask3, inv_len)
    return pooled.reshape(N, H)


# ---------------------------------------------------------------------------
# Kernel 2: cosine-similarity logits + temperature + CE(label=0).
# ---------------------------------------------------------------------------
def _contrastive_loss_kernel(a_ref, p_ref, nt_ref, loss_ref, *, temperature):
    a = a_ref[...].astype(jnp.float32)    # (B, H) anchor embeddings
    p = p_ref[...].astype(jnp.float32)    # (B, H) positive embeddings
    nt = nt_ref[...].astype(jnp.float32)  # (H, M) negatives (pre-transposed)

    eps_sq = 1e-16  # == clamp(norm, 1e-8) applied to the squared norm
    inv_a = jax.lax.rsqrt(jnp.maximum(jnp.sum(a * a, -1, keepdims=True), eps_sq))
    inv_p = jax.lax.rsqrt(jnp.maximum(jnp.sum(p * p, -1, keepdims=True), eps_sq))
    inv_n = jax.lax.rsqrt(jnp.maximum(jnp.sum(nt * nt, 0, keepdims=True), eps_sq))

    # Raw positive dot product; all normalisations deferred to post-dot scales.
    pos_raw = jnp.sum(a * p, axis=-1, keepdims=True)                  # (B, 1)
    # Natural MXU layout: contract H of a with leading H of nt (no vxpose).
    neg_raw = jnp.dot(a, nt, preferred_element_type=jnp.float32)      # (B, M)

    inv_t = 1.0 / temperature
    pos_l = pos_raw * (inv_a * inv_p) * inv_t                         # (B, 1)
    neg_l = neg_raw * inv_a * inv_n * inv_t                           # (B, M)

    # Cross entropy with labels == 0 (the positive column), concat-free:
    # loss_i = logsumexp([pos_l_i, neg_l_i,:]) - pos_l_i
    row_max = jnp.maximum(pos_l, jnp.max(neg_l, axis=-1, keepdims=True))
    sum_exp = (jnp.exp(pos_l - row_max)
               + jnp.sum(jnp.exp(neg_l - row_max), axis=-1, keepdims=True))
    per_example = jnp.log(sum_exp) + row_max - pos_l                  # (B, 1)

    b = per_example.shape[0]
    loss_ref[0, 0] = jnp.sum(per_example) * (1.0 / b)                 # scalar -> SMEM


def contrastive_loss(anchor_embed, pos_embed, neg_embed, *, temperature=0.05,
                     vmem_limit_bytes=None):
    if vmem_limit_bytes is None:
        vmem_limit_bytes = _default_vmem_limit_bytes()
    neg_t = jnp.transpose(neg_embed)  # (H, M): tiny one-off XLA transpose
    kernel = functools.partial(_contrastive_loss_kernel, temperature=temperature)
    out = pl.pallas_call(
        kernel,
        out_shape=jax.ShapeDtypeStruct((1, 1), jnp.float32),
        in_specs=[pl.BlockSpec(memory_space=pltpu.MemorySpace.VMEM)] * 3,
        out_specs=pl.BlockSpec(memory_space=pltpu.MemorySpace.SMEM),
        compiler_params=pltpu.CompilerParams(vmem_limit_bytes=vmem_limit_bytes),
    )(anchor_embed, pos_embed, neg_t)
    return out[0, 0]


def sentence_bert_loss(anchor_h, anchor_m, pos_h, pos_m, neg_h, neg_m,
                       temperature=0.05, *, block_b=None, block_s=None):
    """Masked mean pooling of backbone outputs + contrastive CE loss (label 0)."""
    a = masked_mean_pool(anchor_h, anchor_m, block_b=block_b, block_s=block_s)
    p = masked_mean_pool(pos_h, pos_m, block_b=block_b, block_s=block_s)
    n = masked_mean_pool(neg_h, neg_m, block_b=block_b, block_s=block_s)
    return contrastive_loss(a, p, n, temperature=temperature)


# ---------------------------------------------------------------------------
# Pure-JAX reference mirroring the PyTorch module semantics.
# ---------------------------------------------------------------------------
def _reference_loss(anchor_h, anchor_m, pos_h, pos_m, neg_h, neg_m,
                    temperature=0.05):
    def pool(h, m):
        m3 = m[:, :, None].astype(jnp.float32)
        h = h.astype(jnp.float32)
        return jnp.sum(h * m3, axis=1) / jnp.maximum(jnp.sum(m3, axis=1), 1e-9)

    def cos(x, y):
        eps = 1e-8
        xn = x / jnp.maximum(jnp.linalg.norm(x, axis=-1, keepdims=True), eps)
        yn = y / jnp.maximum(jnp.linalg.norm(y, axis=-1, keepdims=True), eps)
        return jnp.sum(xn * yn, axis=-1)

    a, p, n = pool(anchor_h, anchor_m), pool(pos_h, pos_m), pool(neg_h, neg_m)
    logits_pos = cos(a, p)                               # (B,)
    logits_neg = cos(a[:, None, :], n[None, :, :])       # (B, M)
    logits = jnp.concatenate([logits_pos[:, None], logits_neg], axis=1) / temperature
    lse = jax.scipy.special.logsumexp(logits, axis=1)
    return jnp.mean(lse - logits[:, 0])


if __name__ == "__main__":
    # Small, lane-dense stand-in for the BERT backbone output:
    # batch = 2 sentence triplets, 2 negatives per anchor (flattened -> 4
    # negative sentences), seq_len = 256 (two 128-token seq tiles exercise the
    # resident accumulator), hidden = 128 (full lane width).
    B, NNEG, S, H = 2, 2, 256, 128
    M = B * NNEG
    temperature = 0.05

    key = jax.random.PRNGKey(0)
    k_ah, k_ph, k_nh, k_am, k_pm, k_nm = jax.random.split(key, 6)

    # Synthetic backbone outputs (stand-in for AutoModel.last_hidden_state).
    anchor_h = jax.random.normal(k_ah, (B, S, H), dtype=jnp.float32)
    pos_h = jax.random.normal(k_ph, (B, S, H), dtype=jnp.float32)
    neg_h = jax.random.normal(k_nh, (M, S, H), dtype=jnp.float32)

    def make_mask(k, n):
        # Deterministic ragged lengths in [S//2, S] to exercise masked pooling.
        lens = jax.random.randint(k, (n,), S // 2, S + 1)
        return (jnp.arange(S)[None, :] < lens[:, None]).astype(jnp.float32)

    anchor_m = make_mask(k_am, B)
    pos_m = make_mask(k_pm, B)
    neg_m = make_mask(k_nm, M)

    @jax.jit
    def loss_fn(ah, am, ph, pm, nh, nm):
        # block_s=128 forces a 2-step seq reduction at this toy shape;
        # block_b is chosen by the VMEM-budgeted tile picker.
        return sentence_bert_loss(ah, am, ph, pm, nh, nm,
                                  temperature=temperature, block_s=128)

    # --- f32 path: bit-compatible with the PyTorch-style reference. ---
    loss = jax.block_until_ready(
        loss_fn(anchor_h, anchor_m, pos_h, pos_m, neg_h, neg_m))
    ref = _reference_loss(anchor_h, anchor_m, pos_h, pos_m, neg_h, neg_m,
                          temperature=temperature)
    assert jnp.allclose(loss, ref, rtol=1e-4, atol=1e-4), (loss, ref)

    # --- bf16 hidden states (the bandwidth-saving production path): same
    #     kernels, bf16 tiles DMA'd, f32 MXU accumulation. ---
    ah_bf, ph_bf, nh_bf = (x.astype(jnp.bfloat16) for x in (anchor_h, pos_h, neg_h))
    loss_bf = jax.block_until_ready(
        loss_fn(ah_bf, anchor_m, ph_bf, pos_m, nh_bf, neg_m))
    ref_bf = _reference_loss(ah_bf, anchor_m, ph_bf, pos_m, nh_bf, neg_m,
                             temperature=temperature)
    assert jnp.allclose(loss_bf, ref_bf, rtol=1e-3, atol=1e-3), (loss_bf, ref_bf)

    print("KERNEL_OK")
</pallas_src>

<mosaic_0001>
module attributes {stable_mosaic.version = 11 : i64} {
  func.func @_masked_mean_pool_kernel(%arg0: i32, %arg1: i32, %arg2: memref<1x128x128xf32, #tpu.memory_space<vmem>>, %arg3: memref<1x1x128xf32, #tpu.memory_space<vmem>>, %arg4: memref<1x1x1xf32, #tpu.memory_space<vmem>>, %arg5: memref<1x1x128xf32, #tpu.memory_space<vmem>>, %arg6: memref<1x1x128xf32, #tpu.memory_space<vmem>>) attributes {dimension_semantics = [#tpu.dimension_semantics<parallel>, #tpu.dimension_semantics<arbitrary>], iteration_bounds = array<i64: 2, 2>, scalar_prefetch = 0 : i64, scratch_operands = 1 : i64, tpu.core_type = #tpu.core_type<tc>, window_params = [{transform_indices = @transform_0, window_bounds = array<i64: 1, 128, 128>}, {transform_indices = @transform_1, window_bounds = array<i64: 1, 1, 128>}, {transform_indices = @transform_2, window_bounds = array<i64: 1, 1, 1>}, {transform_indices = @transform_3, window_bounds = array<i64: 1, 1, 128>}]} {
    %c0_i32 = arith.constant 0 : i32
    %0 = arith.cmpi eq, %arg1, %c0_i32 : i32
    %1 = arith.extui %0 : i1 to i32
    %c0_i32_0 = arith.constant 0 : i32
    %2 = arith.cmpi ne, %1, %c0_i32_0 : i32
    scf.if %2 {
      %cst_13 = arith.constant 0.000000e+00 : f32
      %12 = vector.broadcast %cst_13 : f32 to vector<1x1x128xf32>
      %c0_14 = arith.constant 0 : index
      %c0_15 = arith.constant 0 : index
      %c0_16 = arith.constant 0 : index
      %13 = vector.load %arg6[%c0_14, %c0_15, %c0_16] : memref<1x1x128xf32, #tpu.memory_space<vmem>>, vector<1x1x128xf32>
      tpu.vector_store %arg6[%c0_14, %c0_15, %c0_16], %12 {strides = array<i32>} : memref<1x1x128xf32, #tpu.memory_space<vmem>>, vector<1x1x128xf32>,
    } else {
    }
    %c0 = arith.constant 0 : index
    %c0_1 = arith.constant 0 : index
    %c0_2 = arith.constant 0 : index
    %3 = vector.load %arg3[%c0, %c0_1, %c0_2] : memref<1x1x128xf32, #tpu.memory_space<vmem>>, vector<1x1x128xf32>
    %c0_3 = arith.constant 0 : index
    %c0_4 = arith.constant 0 : index
    %c0_5 = arith.constant 0 : index
    %4 = vector.load %arg2[%c0_3, %c0_4, %c0_5] : memref<1x128x128xf32, #tpu.memory_space<vmem>>, vector<1x128x128xf32>
    %c0_6 = arith.constant 0 : index
    %c0_7 = arith.constant 0 : index
    %c0_8 = arith.constant 0 : index
    %5 = vector.load %arg6[%c0_6, %c0_7, %c0_8] : memref<1x1x128xf32, #tpu.memory_space<vmem>>, vector<1x1x128xf32>
    "tpu.trace_start"() <{level = 10 : i32, message = "bks,bsh->bkh"}> : () -> ()
    %cst = arith.constant dense<0.000000e+00> : vector<1x1x128xf32>
    %6 = tpu.matmul %3, %4, %cst {dimension_numbers = #tpu.dot_dimension_numbers<[2], [1], [1], [2], [0, 0, 0, 1, 1, 2], [0], [0]>} : vector<1x1x128xf32>, vector<1x128x128xf32>, vector<1x1x128xf32> -> vector<1x1x128xf32>
    "tpu.trace_stop"() : () -> ()
    %7 = arith.addf %5, %6 : vector<1x1x128xf32>
    %c0_9 = arith.constant 0 : index
    %c0_10 = arith.constant 0 : index
    %c0_11 = arith.constant 0 : index
    %8 = vector.load %arg6[%c0_9, %c0_10, %c0_11] : memref<1x1x128xf32, #tpu.memory_space<vmem>>, vector<1x1x128xf32>
    tpu.vector_store %arg6[%c0_9, %c0_10, %c0_11], %7 {strides = array<i32>} : memref<1x1x128xf32, #tpu.memory_space<vmem>>, vector<1x1x128xf32>,
    %c1_i32 = arith.constant 1 : i32
    %9 = arith.cmpi eq, %arg1, %c1_i32 : i32
    %10 = arith.extui %9 : i1 to i32
    %c0_i32_12 = arith.constant 0 : i32
    %11 = arith.cmpi ne, %10, %c0_i32_12 : i32
    scf.if %11 {
      %c0_13 = arith.constant 0 : index
      %c0_14 = arith.constant 0 : index
      %c0_15 = arith.constant 0 : index
      %12 = vector.load %arg6[%c0_13, %c0_14, %c0_15] : memref<1x1x128xf32, #tpu.memory_space<vmem>>, vector<1x1x128xf32>
      %c0_16 = arith.constant 0 : index
      %c0_17 = arith.constant 0 : index
      %c0_18 = arith.constant 0 : index
      %13 = vector.load %arg4[%c0_16, %c0_17, %c0_18] : memref<1x1x1xf32, #tpu.memory_space<vmem>>, vector<1x1x1xf32>
      %14 = vector.broadcast %13 : vector<1x1x1xf32> to vector<1x1x128xf32>
      %15 = arith.mulf %12, %14 : vector<1x1x128xf32>
      %c0_19 = arith.constant 0 : index
      %c0_20 = arith.constant 0 : index
      %c0_21 = arith.constant 0 : index
      %16 = vector.load %arg5[%c0_19, %c0_20, %c0_21] : memref<1x1x128xf32, #tpu.memory_space<vmem>>, vector<1x1x128xf32>
      tpu.vector_store %arg5[%c0_19, %c0_20, %c0_21], %15 {strides = array<i32>} : memref<1x1x128xf32, #tpu.memory_space<vmem>>, vector<1x1x128xf32>,
    } else {
    }
    return
  }
  func.func @transform_0(%arg0: i32, %arg1: i32) -> (i32, i32, i32) {
    %c0_i32 = arith.constant 0 : i32
    %c0_i32_0 = arith.constant 0 : i32
    return %arg0, %arg1, %c0_i32 : i32, i32, i32
  }
  func.func @transform_1(%arg0: i32, %arg1: i32) -> (i32, i32, i32) {
    %c0_i32 = arith.constant 0 : i32
    %c0_i32_0 = arith.constant 0 : i32
    return %arg0, %c0_i32, %arg1 : i32, i32, i32
  }
  func.func @transform_2(%arg0: i32, %arg1: i32) -> (i32, i32, i32) {
    %c0_i32 = arith.constant 0 : i32
    %c0_i32_0 = arith.constant 0 : i32
    %c0_i32_1 = arith.constant 0 : i32
    return %arg0, %c0_i32, %c0_i32_0 : i32, i32, i32
  }
  func.func @transform_3(%arg0: i32, %arg1: i32) -> (i32, i32, i32) {
    %c0_i32 = arith.constant 0 : i32
    %c0_i32_0 = arith.constant 0 : i32
    %c0_i32_1 = arith.constant 0 : i32
    return %arg0, %c0_i32, %c0_i32_0 : i32, i32, i32
  }
}

module attributes {stable_mosaic.version = 11 : i64} {
  func.func @_contrastive_loss_kernel(%arg0: memref<2x128xf32, #tpu.memory_space<vmem>>, %arg1: memref<2x128xf32, #tpu.memory_space<vmem>>, %arg2: memref<128x4xf32, #tpu.memory_space<vmem>>, %arg3: memref<1x1xf32, #tpu.memory_space<smem>>) attributes {dimension_semantics = [], scalar_prefetch = 0 : i64, scratch_operands = 0 : i64, tpu.core_type = #tpu.core_type<tc>} {
    %c0 = arith.constant 0 : index
    %c0_0 = arith.constant 0 : index
    %0 = vector.load %arg0[%c0, %c0_0] : memref<2x128xf32, #tpu.memory_space<vmem>>, vector<2x128xf32>
    %c0_1 = arith.constant 0 : index
    %c0_2 = arith.constant 0 : index
    %1 = vector.load %arg1[%c0_1, %c0_2] : memref<2x128xf32, #tpu.memory_space<vmem>>, vector<2x128xf32>
    %c0_3 = arith.constant 0 : index
    %c0_4 = arith.constant 0 : index
    %2 = vector.load %arg2[%c0_3, %c0_4] : memref<128x4xf32, #tpu.memory_space<vmem>>, vector<128x4xf32>
    %3 = arith.mulf %0, %0 : vector<2x128xf32>
    %cst = arith.constant dense<0.000000e+00> : vector<2xf32>
    %4 = vector.multi_reduction <add>, %3, %cst [1] : vector<2x128xf32> to vector<2xf32>
    %5 = vector.shape_cast %4 : vector<2xf32> to vector<2x1xf32>
    %cst_5 = arith.constant 1.000000e-16 : f32
    %6 = vector.broadcast %cst_5 : f32 to vector<2x1xf32>
    %7 = arith.maximumf %5, %6 : vector<2x1xf32>
    %8 = math.rsqrt %7 : vector<2x1xf32>
    %9 = arith.mulf %1, %1 : vector<2x128xf32>
    %cst_6 = arith.constant dense<0.000000e+00> : vector<2xf32>
    %10 = vector.multi_reduction <add>, %9, %cst_6 [1] : vector<2x128xf32> to vector<2xf32>
    %11 = vector.shape_cast %10 : vector<2xf32> to vector<2x1xf32>
    %cst_7 = arith.constant 1.000000e-16 : f32
    %12 = vector.broadcast %cst_7 : f32 to vector<2x1xf32>
    %13 = arith.maximumf %11, %12 : vector<2x1xf32>
    %14 = math.rsqrt %13 : vector<2x1xf32>
    %15 = arith.mulf %2, %2 : vector<128x4xf32>
    %cst_8 = arith.constant dense<0.000000e+00> : vector<4xf32>
    %16 = vector.multi_reduction <add>, %15, %cst_8 [0] : vector<128x4xf32> to vector<4xf32>
    %17 = vector.shape_cast %16 : vector<4xf32> to vector<1x4xf32>
    %cst_9 = arith.constant 1.000000e-16 : f32
    %18 = vector.broadcast %cst_9 : f32 to vector<1x4xf32>
    %19 = arith.maximumf %17, %18 : vector<1x4xf32>
    %20 = math.rsqrt %19 : vector<1x4xf32>
    %21 = arith.mulf %0, %1 : vector<2x128xf32>
    %cst_10 = arith.constant dense<0.000000e+00> : vector<2xf32>
    %22 = vector.multi_reduction <add>, %21, %cst_10 [1] : vector<2x128xf32> to vector<2xf32>
    %23 = vector.shape_cast %22 : vector<2xf32> to vector<2x1xf32>
    %cst_11 = arith.constant dense<0.000000e+00> : vector<2x4xf32>
    %24 = tpu.matmul %0, %2, %cst_11 {dimension_numbers = #tpu.dot_dimension_numbers<[1], [0], [0], [1], [0, 0, 1, 1], [], []>} : vector<2x128xf32>, vector<128x4xf32>, vector<2x4xf32> -> vector<2x4xf32>
    %25 = arith.mulf %8, %14 : vector<2x1xf32>
    %26 = arith.mulf %23, %25 : vector<2x1xf32>
    %cst_12 = arith.constant 2.000000e+01 : f32
    %27 = vector.broadcast %cst_12 : f32 to vector<2x1xf32>
    %28 = arith.mulf %26, %27 : vector<2x1xf32>
    %29 = vector.broadcast %8 : vector<2x1xf32> to vector<2x4xf32>
    %30 = arith.mulf %24, %29 : vector<2x4xf32>
    %31 = vector.broadcast %20 : vector<1x4xf32> to vector<2x4xf32>
    %32 = arith.mulf %30, %31 : vector<2x4xf32>
    %cst_13 = arith.constant 2.000000e+01 : f32
    %33 = vector.broadcast %cst_13 : f32 to vector<2x4xf32>
    %34 = arith.mulf %32, %33 : vector<2x4xf32>
    %cst_14 = arith.constant dense<0xFF800000> : vector<2xf32>
    %35 = vector.multi_reduction <maximumf>, %34, %cst_14 [1] : vector<2x4xf32> to vector<2xf32>
    %36 = vector.shape_cast %35 : vector<2xf32> to vector<2x1xf32>
    %37 = arith.maximumf %28, %36 : vector<2x1xf32>
    %38 = arith.subf %28, %37 : vector<2x1xf32>
    %39 = math.exp %38 : vector<2x1xf32>
    %40 = vector.broadcast %37 : vector<2x1xf32> to vector<2x4xf32>
    %41 = arith.subf %34, %40 : vector<2x4xf32>
    %42 = math.exp %41 : vector<2x4xf32>
    %cst_15 = arith.constant dense<0.000000e+00> : vector<2xf32>
    %43 = vector.multi_reduction <add>, %42, %cst_15 [1] : vector<2x4xf32> to vector<2xf32>
    %44 = vector.shape_cast %43 : vector<2xf32> to vector<2x1xf32>
    %45 = arith.addf %39, %44 : vector<2x1xf32>
    %46 = math.log %45 : vector<2x1xf32>
    %47 = arith.addf %46, %37 : vector<2x1xf32>
    %48 = arith.subf %47, %28 : vector<2x1xf32>
    %49 = vector.shape_cast %48 : vector<2x1xf32> to vector<1x2x1xf32>
    %cst_16 = arith.constant dense<0.000000e+00> : vector<1xf32>
    %50 = vector.multi_reduction <add>, %49, %cst_16 [1, 2] : vector<1x2x1xf32> to vector<1xf32>
    %51 = vector.shape_cast %50 : vector<1xf32> to vector<1x1x1xf32>
    %52 = vector.extract %51[0, 0, 0] : f32 from vector<1x1x1xf32>
    %cst_17 = arith.constant 5.000000e-01 : f32
    %53 = arith.mulf %52, %cst_17 : f32
    %c0_18 = arith.constant 0 : index
    %c0_19 = arith.constant 0 : index
    %54 = memref.load %arg3[%c0_18, %c0_19] : memref<1x1xf32, #tpu.memory_space<smem>>
    memref.store %53, %arg3[%c0_18, %c0_19] : memref<1x1xf32, #tpu.memory_space<smem>>
    return
  }
}

module attributes {stable_mosaic.version = 11 : i64} {
  func.func @_masked_mean_pool_kernel(%arg0: i32, %arg1: i32, %arg2: memref<2x128x128xf32, #tpu.memory_space<vmem>>, %arg3: memref<2x1x128xf32, #tpu.memory_space<vmem>>, %arg4: memref<2x1x1xf32, #tpu.memory_space<vmem>>, %arg5: memref<2x1x128xf32, #tpu.memory_space<vmem>>, %arg6: memref<2x1x128xf32, #tpu.memory_space<vmem>>) attributes {dimension_semantics = [#tpu.dimension_semantics<parallel>, #tpu.dimension_semantics<arbitrary>], iteration_bounds = array<i64: 2, 2>, scalar_prefetch = 0 : i64, scratch_operands = 1 : i64, tpu.core_type = #tpu.core_type<tc>, window_params = [{transform_indices = @transform_0, window_bounds = array<i64: 2, 128, 128>}, {transform_indices = @transform_1, window_bounds = array<i64: 2, 1, 128>}, {transform_indices = @transform_2, window_bounds = array<i64: 2, 1, 1>}, {transform_indices = @transform_3, window_bounds = array<i64: 2, 1, 128>}]} {
    %c0_i32 = arith.constant 0 : i32
    %0 = arith.cmpi eq, %arg1, %c0_i32 : i32
    %1 = arith.extui %0 : i1 to i32
    %c0_i32_0 = arith.constant 0 : i32
    %2 = arith.cmpi ne, %1, %c0_i32_0 : i32
    scf.if %2 {
      %cst_13 = arith.constant 0.000000e+00 : f32
      %12 = vector.broadcast %cst_13 : f32 to vector<2x1x128xf32>
      %c0_14 = arith.constant 0 : index
      %c0_15 = arith.constant 0 : index
      %c0_16 = arith.constant 0 : index
      %13 = vector.load %arg6[%c0_14, %c0_15, %c0_16] : memref<2x1x128xf32, #tpu.memory_space<vmem>>, vector<2x1x128xf32>
      tpu.vector_store %arg6[%c0_14, %c0_15, %c0_16], %12 {strides = array<i32>} : memref<2x1x128xf32, #tpu.memory_space<vmem>>, vector<2x1x128xf32>,
    } else {
    }
    %c0 = arith.constant 0 : index
    %c0_1 = arith.constant 0 : index
    %c0_2 = arith.constant 0 : index
    %3 = vector.load %arg3[%c0, %c0_1, %c0_2] : memref<2x1x128xf32, #tpu.memory_space<vmem>>, vector<2x1x128xf32>
    %c0_3 = arith.constant 0 : index
    %c0_4 = arith.constant 0 : index
    %c0_5 = arith.constant 0 : index
    %4 = vector.load %arg2[%c0_3, %c0_4, %c0_5] : memref<2x128x128xf32, #tpu.memory_space<vmem>>, vector<2x128x128xf32>
    %c0_6 = arith.constant 0 : index
    %c0_7 = arith.constant 0 : index
    %c0_8 = arith.constant 0 : index
    %5 = vector.load %arg6[%c0_6, %c0_7, %c0_8] : memref<2x1x128xf32, #tpu.memory_space<vmem>>, vector<2x1x128xf32>
    "tpu.trace_start"() <{level = 10 : i32, message = "bks,bsh->bkh"}> : () -> ()
    %cst = arith.constant dense<0.000000e+00> : vector<2x1x128xf32>
    %6 = tpu.matmul %3, %4, %cst {dimension_numbers = #tpu.dot_dimension_numbers<[2], [1], [1], [2], [0, 0, 0, 1, 1, 2], [0], [0]>} : vector<2x1x128xf32>, vector<2x128x128xf32>, vector<2x1x128xf32> -> vector<2x1x128xf32>
    "tpu.trace_stop"() : () -> ()
    %7 = arith.addf %5, %6 : vector<2x1x128xf32>
    %c0_9 = arith.constant 0 : index
    %c0_10 = arith.constant 0 : index
    %c0_11 = arith.constant 0 : index
    %8 = vector.load %arg6[%c0_9, %c0_10, %c0_11] : memref<2x1x128xf32, #tpu.memory_space<vmem>>, vector<2x1x128xf32>
    tpu.vector_store %arg6[%c0_9, %c0_10, %c0_11], %7 {strides = array<i32>} : memref<2x1x128xf32, #tpu.memory_space<vmem>>, vector<2x1x128xf32>,
    %c1_i32 = arith.constant 1 : i32
    %9 = arith.cmpi eq, %arg1, %c1_i32 : i32
    %10 = arith.extui %9 : i1 to i32
    %c0_i32_12 = arith.constant 0 : i32
    %11 = arith.cmpi ne, %10, %c0_i32_12 : i32
    scf.if %11 {
      %c0_13 = arith.constant 0 : index
      %c0_14 = arith.constant 0 : index
      %c0_15 = arith.constant 0 : index
      %12 = vector.load %arg6[%c0_13, %c0_14, %c0_15] : memref<2x1x128xf32, #tpu.memory_space<vmem>>, vector<2x1x128xf32>
      %c0_16 = arith.constant 0 : index
      %c0_17 = arith.constant 0 : index
      %c0_18 = arith.constant 0 : index
      %13 = vector.load %arg4[%c0_16, %c0_17, %c0_18] : memref<2x1x1xf32, #tpu.memory_space<vmem>>, vector<2x1x1xf32>
      %14 = vector.broadcast %13 : vector<2x1x1xf32> to vector<2x1x128xf32>
      %15 = arith.mulf %12, %14 : vector<2x1x128xf32>
      %c0_19 = arith.constant 0 : index
      %c0_20 = arith.constant 0 : index
      %c0_21 = arith.constant 0 : index
      %16 = vector.load %arg5[%c0_19, %c0_20, %c0_21] : memref<2x1x128xf32, #tpu.memory_space<vmem>>, vector<2x1x128xf32>
      tpu.vector_store %arg5[%c0_19, %c0_20, %c0_21], %15 {strides = array<i32>} : memref<2x1x128xf32, #tpu.memory_space<vmem>>, vector<2x1x128xf32>,
    } else {
    }
    return
  }
  func.func @transform_0(%arg0: i32, %arg1: i32) -> (i32, i32, i32) {
    %c0_i32 = arith.constant 0 : i32
    %c0_i32_0 = arith.constant 0 : i32
    return %arg0, %arg1, %c0_i32 : i32, i32, i32
  }
  func.func @transform_1(%arg0: i32, %arg1: i32) -> (i32, i32, i32) {
    %c0_i32 = arith.constant 0 : i32
    %c0_i32_0 = arith.constant 0 : i32
    return %arg0, %c0_i32, %arg1 : i32, i32, i32
  }
  func.func @transform_2(%arg0: i32, %arg1: i32) -> (i32, i32, i32) {
    %c0_i32 = arith.constant 0 : i32
    %c0_i32_0 = arith.constant 0 : i32
    %c0_i32_1 = arith.constant 0 : i32
    return %arg0, %c0_i32, %c0_i32_0 : i32, i32, i32
  }
  func.func @transform_3(%arg0: i32, %arg1: i32) -> (i32, i32, i32) {
    %c0_i32 = arith.constant 0 : i32
    %c0_i32_0 = arith.constant 0 : i32
    %c0_i32_1 = arith.constant 0 : i32
    return %arg0, %c0_i32, %c0_i32_0 : i32, i32, i32
  }
}

</mosaic_0001>

<llo_original>
// kernel: loss_fn.4
$region0: #{loss_fn.4}
  #allocation0 [shape = 'u32[]', space=smem, size = 0x4, offset = 0x4, fixed_abs, tag = 'smem constant byte address 0x4 - core index']
  #allocation1 [shape = 'u32[144,128]{1,0:T(1,128)}', space=vmem, size = 0x12000, scoped, tag = 'internal scratch']
  #allocation2 [shape = 'f32[1,1,128]{2,1,0:T(1,128)}', space=vmem, size = 0x200, scoped, tag = 'scratch operand']
  %s0 = inlined_call_operand.hbm [shape: f32[2,256,128], index: 0, kind: input, shape index: {}]
  %s1 = inlined_call_operand.vmem [shape: f32[2,1,256], index: 1, kind: input, shape index: {}]
  %s2 = inlined_call_operand.vmem [shape: f32[2,1,1], index: 2, kind: input, shape index: {}]
  %s3 = inlined_call_operand.vmem [shape: f32[2,1,128], index: 3, kind: output, shape index: {}]
  %s4 = sld [smem:[#allocation0]]
  $region57: #{loss_fn.4} parent=0
    _
  %s6 = ssub.s32 1, %s4
  %s7 = scalar_select 0, %s6, %s4
  $region1: #{loss_fn.4} parent=0
    #allocation3 [shape = 'u8[131072]{0}', space=vmem, size = 0x20000, scoped, tag = 'input window, operand 0']
    #allocation4 [shape = 's32[2]{0}', space=sflag, size = 0x8, scoped, tag = 'scoped memory for loss_fn.4']
    %8 = vsyncpa [#allocation4], 0
    %s9 = scalar_lea.sflag [#allocation4], 1
    %10 = vsyncpa %s9, 0
    loop: start=0, step=1, limit=6
    $region2: #{loss_fn.4} parent=1 // loop_pre_header
      _
    $region3: #{loss_fn.4} parent=1 // loop_header
      %s12 = sphi 0, %s16
      %p13 = scmp.ge.s32.totalorder %s12, 6
      %s19 = sphi 0, %s31
      %s20 = sphi 0, %s27
      %s21 = sphi 0, %s19
      %s22 = sphi 0, %s20
      %s23 = sphi 0, %s21
      %s24 = sphi 0, %s22
      %s36 = sphi 0, %s38
      %s39 = sphi 0, %s36
      %s40 = sphi 0, %s39
      %s56 = sphi 0, %s40
      %s64 = sphi 0, %s66
      %s67 = sphi 0, %s64
      %s68 = sphi 0, %s67
      %s84 = sphi 0, %s68
      %s90 = sphi 0, %s92
      %s93 = sphi 0, %s90
      %s94 = sphi 0, %s93
      %s110 = sphi 0, %s94
      %s116 = sphi 0, %s118
      %s119 = sphi 0, %s116
      %s120 = sphi 0, %s119
      %s136 = sphi 0, %s120
    $region4: #{loss_fn.4} parent=1 // loop_header_branch
      %15 = sbr.rel (%p13) target = $region8
    $region5: #{loss_fn.4} parent=1 // loop_body
      %s17 = ssub.s32 %s12, 1
      %s18 = ssub.s32 %s12, 2
      %s25 = sadd.s32 1, %s20
      %p26 = scmp.ge.s32.totalorder %s25, 2
      %s27 = scalar_select %p26, 0, %s25
      %s28 = sadd.s32 1, %s19
      %s29 = scalar_select %p26, %s28, %s19
      %p30 = scmp.ge.s32.totalorder %s29, 2
      %s31 = scalar_select %p30, 0, %s29
      %s32 = ssub.s32 %s19, %s31
      %s33 = ssub.s32 %s20, %s27
      %s34 = sor.u32 %s32, %s33
      %p35 = scmp.eq.s32.totalorder %s34, 0
      %s37 = sadd.s32 %s36, 1
      %s38 = scalar_select %p35, %s36, %s37
      %p41 = pneg %p35
      %p42 = scmp.eq.s32.totalorder %s12, 3
      %p43 = por %p41, %p42
      %p44 = scmp.ne.s32.totalorder %s36, %s39
      %p45 = scmp.eq.s32.totalorder %s12, 0
      %p46 = por %p44, %p45
      %p47 = scmp.ne.s32.totalorder %s36, %s39
      %p48 = scmp.eq.s32.totalorder %s17, 3
      %p49 = por %p47, %p48
      %p50 = scmp.ne.s32.totalorder %s39, %s40
      %p51 = scmp.eq.s32.totalorder %s17, 0
      %p52 = por %p50, %p51
      %p53 = scmp.ne.s32.totalorder %s39, %s40
      %p54 = scmp.eq.s32.totalorder %s18, 3
      %p55 = por %p53, %p54
      %p57 = scmp.ne.s32.totalorder %s40, %s56
      %p58 = scmp.eq.s32.totalorder %s18, 0
      %p59 = por %p57, %p58
      %s60 = ssub.s32 %s19, %s31
      %s61 = ssub.s32 %s20, %s27
      %s62 = sor.u32 %s60, %s61
      %p63 = scmp.eq.s32.totalorder %s62, 0
      %s65 = sadd.s32 %s64, 1
      %s66 = scalar_select %p63, %s64, %s65
      %p69 = pneg %p63
      %p70 = scmp.eq.s32.totalorder %s12, 3
      %p71 = por %p69, %p70
      %p72 = scmp.ne.s32.totalorder %s64, %s67
      %p73 = scmp.eq.s32.totalorder %s12, 0
      %p74 = por %p72, %p73
      %p75 = scmp.ne.s32.totalorder %s64, %s67
      %p76 = scmp.eq.s32.totalorder %s17, 3
      %p77 = por %p75, %p76
      %p78 = scmp.ne.s32.totalorder %s67, %s68
      %p79 = scmp.eq.s32.totalorder %s17, 0
      %p80 = por %p78, %p79
      %p81 = scmp.ne.s32.totalorder %s67, %s68
      %p82 = scmp.eq.s32.totalorder %s18, 3
      %p83 = por %p81, %p82
      %p85 = scmp.ne.s32.totalorder %s68, %s84
      %p86 = scmp.eq.s32.totalorder %s18, 0
      %p87 = por %p85, %p86
      %s88 = ssub.s32 %s19, %s31
      %p89 = scmp.eq.s32.totalorder %s88, 0
      %s91 = sadd.s32 %s90, 1
      %s92 = scalar_select %p89, %s90, %s91
      %p95 = pneg %p89
      %p96 = scmp.eq.s32.totalorder %s12, 3
      %p97 = por %p95, %p96
      %p98 = scmp.ne.s32.totalorder %s90, %s93
      %p99 = scmp.eq.s32.totalorder %s12, 0
      %p100 = por %p98, %p99
      %p101 = scmp.ne.s32.totalorder %s90, %s93
      %p102 = scmp.eq.s32.totalorder %s17, 3
      %p103 = por %p101, %p102
      %p104 = scmp.ne.s32.totalorder %s93, %s94
      %p105 = scmp.eq.s32.totalorder %s17, 0
      %p106 = por %p104, %p105
      %p107 = scmp.ne.s32.totalorder %s93, %s94
      %p108 = scmp.eq.s32.totalorder %s18, 3
      %p109 = por %p107, %p108
      %p111 = scmp.ne.s32.totalorder %s94, %s110
      %p112 = scmp.eq.s32.totalorder %s18, 0
      %p113 = por %p111, %p112
      %s114 = ssub.s32 %s19, %s31
      %p115 = scmp.eq.s32.totalorder %s114, 0
      %s117 = sadd.s32 %s116, 1
      %s118 = scalar_select %p115, %s116, %s117
      %p121 = pneg %p115
      %p122 = scmp.eq.s32.totalorder %s12, 3
      %p123 = por %p121, %p122
      %p124 = scmp.ne.s32.totalorder %s116, %s119
      %p125 = scmp.eq.s32.totalorder %s12, 0
      %p126 = por %p124, %p125
      %p127 = scmp.ne.s32.totalorder %s116, %s119
      %p128 = scmp.eq.s32.totalorder %s17, 3
      %p129 = por %p127, %p128
      %p130 = scmp.ne.s32.totalorder %s119, %s120
      %p131 = scmp.eq.s32.totalorder %s17, 0
      %p132 = por %p130, %p131
      %p133 = scmp.ne.s32.totalorder %s119, %s120
      %p134 = scmp.eq.s32.totalorder %s18, 3
      %p135 = por %p133, %p134
      %p137 = scmp.ne.s32.totalorder %s120, %s136
      %p138 = scmp.eq.s32.totalorder %s18, 0
      %p139 = por %p137, %p138
      %p140 = scmp.le.s32.totalorder 1, %s12
      %p141 = scmp.lt.s32.totalorder %s12, 5
      %p142 = pnand %p140, %p141
      %p143 = pneg %p142
      // Predicated region
      $region9: #{loss_fn.4} parent=5 // pred_check
        _
      $region10: #{loss_fn.4} parent=5 // pred_check_branch
        %145 = sbr.rel (%p142) target = $region12
      $region11: #{loss_fn.4} parent=5 // pred_region
        %s146 = ssub.s32 %s12, 1
      $region12: #{loss_fn.4} parent=5 // pred_fallthru
        _
      %p147 = scmp.lt.s32.totalorder %s12, 4
      // Predicated region
      $region13: #{loss_fn.4} parent=5 // pred_check
        %p148 = pneg %p147
      $region14: #{loss_fn.4} parent=5 // pred_check_branch
        %150 = sbr.rel (%p148) target = $region16
      $region15: #{loss_fn.4} parent=5 // pred_region
        // Predicated region
        $region17: #{loss_fn.4} parent=15 // pred_check
          %p151 = pneg %p46
        $region18: #{loss_fn.4} parent=15 // pred_check_branch
          %153 = sbr.rel (%p151) target = $region20
        $region19: #{loss_fn.4} parent=15 // pred_region
          %s154 = sand.u32 %s36, 1
          %s155 = scalar_lea.sflag [#allocation4], %s154
          %s156 = sand.u32 %s36, 1
          %s157 = smul.addr %s156, 128
          %s158 = scalar_lea.vmem [#allocation3], %s157
          %s159 = smul.u32 16, %s20
          %s161 = ssub.s32 2048, 2048
          %162 = vsyncadd %s155, %s161
          %s163 = smul.addr %s19, 32
          %s164 = sadd.s32 %s159, %s163
          %s165 = smul.addr %s164, 128
          %s166 = scalar_lea.hbm %s0, %s165
          %s167 = sshll.u32 %s158, 4
          %s168 = int_to_ptr.vmem [resolvable:$true] %s167
          %173 = dma.hbm_to_vmem [thread:$0]  %s166, 2048, %s168, %s155, 128, 128, 8
        $region20: #{loss_fn.4} parent=15 // pred_fallthru
          _
        // Predicated region
        $region21: #{loss_fn.4} parent=15 // pred_check
          %p174 = pneg %p74
        $region22: #{loss_fn.4} parent=15 // pred_check_branch
          %176 = sbr.rel (%p174) target = $region24
        $region23: #{loss_fn.4} parent=15 // pred_region
          %p177 = scmp.lt.s32.totalorder %s19, 1
          %s178 = scalar_select %p177, %s19, 1
          %p179 = scmp.lt.s32.totalorder %s20, 1
          %s180 = scalar_select %p179, %s20, 1
          %s181 = smul.addr %s178, 2
          %s182 = sadd.s32 %s180, %s181
          %s183 = scalar_lea.vmem %s1, %s182
        $region24: #{loss_fn.4} parent=15 // pred_fallthru
          _
        // Predicated region
        $region25: #{loss_fn.4} parent=15 // pred_check
          %p184 = pneg %p100
        $region26: #{loss_fn.4} parent=15 // pred_check_branch
          %186 = sbr.rel (%p184) target = $region28
        $region27: #{loss_fn.4} parent=15 // pred_region
          %p187 = scmp.lt.s32.totalorder %s19, 1
          %s188 = scalar_select %p187, %s19, 1
          %s189 = scalar_lea.vmem %s2, %s188
        $region28: #{loss_fn.4} parent=15 // pred_fallthru
          _
      $region16: #{loss_fn.4} parent=5 // pred_fallthru
        _
      %p190 = scmp.le.s32.totalorder 1, %s12
      %p191 = scmp.lt.s32.totalorder %s12, 5
      %p192 = pnand %p190, %p191
      %p193 = pneg %p192
      // Predicated region
      $region29: #{loss_fn.4} parent=5 // pred_check
        _
      $region30: #{loss_fn.4} parent=5 // pred_check_branch
        %195 = sbr.rel (%p192) target = $region32
      $region31: #{loss_fn.4} parent=5 // pred_region
        %s196 = ssub.s32 %s12, 1
        %s197 = sand.u32 %s39, 1
        %s198 = scalar_lea.sflag [#allocation4], %s197
        %s199 = sand.u32 %s39, 1
        %s200 = smul.addr %s199, 128
        %s201 = scalar_lea.vmem [#allocation3], %s200
        // Predicated region
        $region33: #{loss_fn.4} parent=31 // pred_check
          %p202 = pneg %p52
        $region34: #{loss_fn.4} parent=31 // pred_check_branch
          %204 = sbr.rel (%p202) target = $region36
        $region35: #{loss_fn.4} parent=31 // pred_region
          %205 = dma.done %s198, 2048
        $region36: #{loss_fn.4} parent=31 // pred_fallthru
          _
        %s206 = sand.u32 %s39, 1
        %s207 = scalar_lea.sflag [#allocation4], %s206
        %s208 = sand.u32 %s39, 1
        %s209 = smul.addr %s208, 128
        %s210 = scalar_lea.vmem [#allocation3], %s209
        %p211 = pneg %p52
        %p212 = pneg %p49
        %p213 = scmp.lt.s32.totalorder %s21, 1
        %s214 = scalar_select %p213, %s21, 1
        %p215 = scmp.lt.s32.totalorder %s22, 1
        %s216 = scalar_select %p215, %s22, 1
        %s217 = smul.addr %s214, 2
        %s218 = sadd.s32 %s216, %s217
        %s219 = scalar_lea.vmem %s1, %s218
        %p220 = pneg %p80
        %p221 = pneg %p77
        %p222 = scmp.lt.s32.totalorder %s21, 1
        %s223 = scalar_select %p222, %s21, 1
        %s224 = scalar_lea.vmem %s2, %s223
        %p225 = pneg %p106
        %p226 = pneg %p103
        %p227 = pneg %p132
        %p228 = pneg %p129
        %p229 = scmp.lt.s32.totalorder %s21, 1
        %s230 = scalar_select %p229, %s21, 1
        %s231 = scalar_lea.vmem %s3, %s230
        %s232 = smul.u32 16, %s22
        %p233 = scmp.lt.s32.totalorder %s21, 1
        %s234 = scalar_select %p233, %s21, 1
        %p235 = scmp.lt.s32.totalorder %s22, 1
        %s236 = scalar_select %p235, %s22, 1
        %s237 = smul.addr %s234, 2
        %s238 = sadd.s32 %s236, %s237
        %s239 = scalar_lea.vmem %s1, %s238
        %p240 = scmp.lt.s32.totalorder %s21, 1
        %s241 = scalar_select %p240, %s21, 1
        %s242 = scalar_lea.vmem %s2, %s241
        %p243 = scmp.lt.s32.totalorder %s21, 1
        %s244 = scalar_select %p243, %s21, 1
        %s245 = scalar_lea.vmem %s3, %s244
        %p246 = scmp.eq.s32.totalorder %s22, 0
        // Predicated region
        $region37: #{loss_fn.4} parent=31 // pred_check
          %p247 = pneg %p246
        $region38: #{loss_fn.4} parent=31 // pred_check_branch
          %249 = sbr.rel (%p247) target = $region40
        $region39: #{loss_fn.4} parent=31 // pred_region
          %250 = vst [vmem:[#allocation2] sm:$0x1] 0.0
        $region40: #{loss_fn.4} parent=31 // pred_fallthru
          _
        %v251 = vld [vmem:[%s239] sm:$0x1]
        %v252 = vld [vmem:[%s201] sm:$0xff]
        %v253 = vld [vmem:[%s201 + $0x8] sm:$0xff]
        %v254 = vld [vmem:[%s201 + $0x10] sm:$0xff]
        %v255 = vld [vmem:[%s201 + $0x18] sm:$0xff]
        %v256 = vld [vmem:[%s201 + $0x20] sm:$0xff]
        %v257 = vld [vmem:[%s201 + $0x28] sm:$0xff]
        %v258 = vld [vmem:[%s201 + $0x30] sm:$0xff]
        %v259 = vld [vmem:[%s201 + $0x38] sm:$0xff]
        %v260 = vld [vmem:[%s201 + $0x40] sm:$0xff]
        %v261 = vld [vmem:[%s201 + $0x48] sm:$0xff]
        %v262 = vld [vmem:[%s201 + $0x50] sm:$0xff]
        %v263 = vld [vmem:[%s201 + $0x58] sm:$0xff]
        %v264 = vld [vmem:[%s201 + $0x60] sm:$0xff]
        %v265 = vld [vmem:[%s201 + $0x68] sm:$0xff]
        %v266 = vld [vmem:[%s201 + $0x70] sm:$0xff]
        %v267 = vld [vmem:[%s201 + $0x78] sm:$0xff]
        %v268 = vld [vmem:[#allocation2] sm:$0x1]
        %269 = vmatprep.subr.mxu0 0.0
        %270 = vmatpush1.msra.mxu0 %v267
        %271 = vmatprep.subr.mxu0 0.0
        %272 = vmatpush1.msra.mxu0 %v266
        %273 = vmatprep.subr.mxu0 0.0
        %274 = vmatpush1.msra.mxu0 %v265
        %275 = vmatprep.subr.mxu0 0.0
        %276 = vmatpush1.msra.mxu0 %v264
        %277 = vmatprep.subr.mxu0 0.0
        %278 = vmatpush1.msra.mxu0 %v263
        %279 = vmatprep.subr.mxu0 0.0
        %280 = vmatpush1.msra.mxu0 %v262
        %281 = vmatprep.subr.mxu0 0.0
        %282 = vmatpush1.msra.mxu0 %v261
        %283 = vmatprep.subr.mxu0 0.0
        %284 = vmatpush1.msra.mxu0 %v260
        %285 = vmatprep.subr.mxu0 0.0
        %286 = vmatpush1.msra.mxu0 %v259
        %287 = vmatprep.subr.mxu0 0.0
        %288 = vmatpush1.msra.mxu0 %v258
        %289 = vmatprep.subr.mxu0 0.0
        %290 = vmatpush1.msra.mxu0 %v257
        %291 = vmatprep.subr.mxu0 0.0
        %292 = vmatpush1.msra.mxu0 %v256
        %293 = vmatprep.subr.mxu0 0.0
        %294 = vmatpush1.msra.mxu0 %v255
        %295 = vmatprep.subr.mxu0 0.0
        %296 = vmatpush1.msra.mxu0 %v254
        %297 = vmatprep.subr.mxu0 0.0
        %298 = vmatpush1.msra.mxu0 %v253
        %299 = vmatprep.subr.mxu0 0.0
        %300 = vmatpush1.msra.mxu0 %v252
        %301 = vmatprep.subr.mxu0 0.0
        %302 = vmatpush2.msra.mxu0 0.0
        %303 = vmatprep.subr.mxu0 0.0
        %304 = vmatpush2.msra.mxu0 0.0
        %305 = vmatprep.subr.mxu0 0.0
        %306 = vmatpush2.msra.mxu0 0.0
        %307 = vmatprep.subr.mxu0 0.0
        %308 = vmatpush2.msra.mxu0 0.0
        %309 = vmatprep.subr.mxu0 0.0
        %310 = vmatpush2.msra.mxu0 0.0
        %311 = vmatprep.subr.mxu0 0.0
        %312 = vmatpush2.msra.mxu0 0.0
        %313 = vmatprep.subr.mxu0 0.0
        %314 = vmatpush2.msra.mxu0 0.0
        %315 = vmatprep.subr.mxu0 0.0
        %316 = vmatpush2.msra.mxu0 0.0
        %317 = vmatprep.subr.mxu0 0.0
        %318 = vmatpush2.msra.mxu0 0.0
        %319 = vmatprep.subr.mxu0 0.0
        %320 = vmatpush2.msra.mxu0 0.0
        %321 = vmatprep.subr.mxu0 0.0
        %322 = vmatpush2.msra.mxu0 0.0
        %323 = vmatprep.subr.mxu0 0.0
        %324 = vmatpush2.msra.mxu0 0.0
        %325 = vmatprep.subr.mxu0 0.0
        %326 = vmatpush2.msra.mxu0 0.0
        %327 = vmatprep.subr.mxu0 0.0
        %328 = vmatpush2.msra.mxu0 0.0
        %329 = vmatprep.subr.mxu0 0.0
        %330 = vmatpush2.msra.mxu0 0.0
        %331 = vmatprep.subr.mxu0 0.0
        %332 = vmatpush2.msra.mxu0 0.0
        %333 = vmatprep.mubr.f32.mxu0 0.0
        %334 = vmatmul.mubr.f32.gmra.mxu0 %v251
        %v335 = vpop.f32.mrf.mxu0
        %v336 = vadd.f32 0.0, %v335
        %v337 = vpop.f32.mrf.mxu0
        %338 = vdwg.mxu0
        %v339 = vadd.f32 %v268, %v336
        %340 = vst [vmem:[#allocation2] sm:$0x1] %v339
        %p341 = scmp.eq.s32.totalorder %s22, 1
        // Predicated region
        $region41: #{loss_fn.4} parent=31 // pred_check
          %p342 = pneg %p341
        $region42: #{loss_fn.4} parent=31 // pred_check_branch
          %344 = sbr.rel (%p342) target = $region44
        $region43: #{loss_fn.4} parent=31 // pred_region
          %v345 = vld [vmem:[#allocation2] sm:$0x1]
          %v346 = vld [vmem:[%s242] sm:$0x1]
          %348 = vset.pattern.permute.xlu0 0
          %349 = vperm.xlu0 %348, %v346
          %v350 = vpop.permute.xlu0 %349
          %v352 = vlaneseq
          %v353 = vshrl.u32 %v352, 7
          %v354 = vsub.s32 0, %v353
          %v355 = vrot.slane %v350, %v354
          %v356 = vmul.f32 %v345, %v355
          %357 = vst [vmem:[%s245] sm:$0x1] %v356
        $region44: #{loss_fn.4} parent=31 // pred_fallthru
          _
        %p358 = scmp.lt.s32.totalorder %s21, 1
        %s359 = scalar_select %p358, %s21, 1
        %s360 = scalar_lea.vmem %s3, %s359
        // Predicated region
        $region45: #{loss_fn.4} parent=31 // pred_check
          %p361 = pneg %p129
        $region46: #{loss_fn.4} parent=31 // pred_check_branch
          %363 = sbr.rel (%p361) target = $region48
        $region47: #{loss_fn.4} parent=31 // pred_region
          _
        $region48: #{loss_fn.4} parent=31 // pred_fallthru
          _
      $region32: #{loss_fn.4} parent=5 // pred_fallthru
        _
      %p364 = scmp.le.s32.totalorder 2, %s12
      // Predicated region
      $region49: #{loss_fn.4} parent=5 // pred_check
        %p365 = pneg %p364
      $region50: #{loss_fn.4} parent=5 // pred_check_branch
        %367 = sbr.rel (%p365) target = $region52
      $region51: #{loss_fn.4} parent=5 // pred_region
        %s368 = ssub.s32 %s12, 2
        // Predicated region
        $region53: #{loss_fn.4} parent=51 // pred_check
          %p369 = pneg %p135
        $region54: #{loss_fn.4} parent=51 // pred_check_branch
          %371 = sbr.rel (%p369) target = $region56
        $region55: #{loss_fn.4} parent=51 // pred_region
          %p372 = scmp.lt.s32.totalorder %s23, 1
          %s373 = scalar_select %p372, %s23, 1
          %s374 = scalar_lea.vmem %s3, %s373
        $region56: #{loss_fn.4} parent=51 // pred_fallthru
          _
      $region52: #{loss_fn.4} parent=5 // pred_fallthru
        _
    $region6: #{loss_fn.4} parent=1 // loop_footer
      %s16 = sadd.s32 1, %s12
    $region7: #{loss_fn.4} parent=1 // loop_footer_branch
      %11 = sbr.rel target = $region3
    $region8: #{loss_fn.4} parent=1 // loop_exit
      _
    %375 = vsyncpa [#allocation4], 1
    %s376 = scalar_lea.sflag [#allocation4], 1
    %377 = vsyncpa %s376, 1

// kernel: loss_fn.7
$region0: #{loss_fn.7}
  #allocation0 [shape = 'u32[]', space=smem, size = 0x4, offset = 0x4, fixed_abs, tag = 'smem constant byte address 0x4 - core index']
  #allocation1 [shape = 'u32[144,128]{1,0:T(1,128)}', space=vmem, size = 0x12000, scoped, tag = 'internal scratch']
  %s0 = inlined_call_operand.vmem [shape: f32[2,128], index: 0, kind: input, shape index: {}]
  %s1 = inlined_call_operand.vmem [shape: f32[2,128], index: 1, kind: input, shape index: {}]
  %s2 = inlined_call_operand.vmem [shape: f32[128,4], index: 2, kind: input, shape index: {}]
  %s3 = inlined_call_operand.hbm [shape: f32[1,1], index: 3, kind: output, shape index: {}]
  %s4 = sld [smem:[#allocation0]]
  $region22: #{loss_fn.7} parent=0
    _
  %s6 = ssub.s32 1, %s4
  %s7 = scalar_select 0, %s6, %s4
  $region1: #{loss_fn.7} parent=0
    #allocation2 [shape = 'u8[512]{0}', space=smem, size = 0x200, scoped, tag = 'output window, operand 0, single buffered']
    #allocation3 [shape = 's32[1]{0}', space=sflag, size = 0x4, scoped, tag = 'scoped memory for loss_fn.7']
    %8 = vsyncpa [#allocation3], 0
    // Predicated region
    $region2: #{loss_fn.7} parent=1 // pred_check
      _
    $region3: #{loss_fn.7} parent=1 // pred_check_branch
      %10 = sbr.rel (0) target = $region5
    $region4: #{loss_fn.7} parent=1 // pred_region
      _
    $region5: #{loss_fn.7} parent=1 // pred_fallthru
      _
    // Predicated region
    $region6: #{loss_fn.7} parent=1 // pred_check
      _
    $region7: #{loss_fn.7} parent=1 // pred_check_branch
      %12 = sbr.rel (0) target = $region9
    $region8: #{loss_fn.7} parent=1 // pred_region
      _
    $region9: #{loss_fn.7} parent=1 // pred_fallthru
      _
    // Predicated region
    $region10: #{loss_fn.7} parent=1 // pred_check
      _
    $region11: #{loss_fn.7} parent=1 // pred_check_branch
      %14 = sbr.rel (0) target = $region13
    $region12: #{loss_fn.7} parent=1 // pred_region
      _
    $region13: #{loss_fn.7} parent=1 // pred_fallthru
      _
    %v15 = vld [vmem:[%s0] sm:$0x3]
    %v16 = vld [vmem:[%s1] sm:$0x3]
    %v17 = vld [vmem:[%s2] sm:$0xff]
    %v18 = vld [vmem:[%s2 + $0x8] sm:$0xff]
    %v19 = vld [vmem:[%s2 + $0x10] sm:$0xff]
    %v20 = vld [vmem:[%s2 + $0x18] sm:$0xff]
    %v21 = vld [vmem:[%s2 + $0x20] sm:$0xff]
    %v22 = vld [vmem:[%s2 + $0x28] sm:$0xff]
    %v23 = vld [vmem:[%s2 + $0x30] sm:$0xff]
    %v24 = vld [vmem:[%s2 + $0x38] sm:$0xff]
    %v25 = vld [vmem:[%s2 + $0x40] sm:$0xff]
    %v26 = vld [vmem:[%s2 + $0x48] sm:$0xff]
    %v27 = vld [vmem:[%s2 + $0x50] sm:$0xff]
    %v28 = vld [vmem:[%s2 + $0x58] sm:$0xff]
    %v29 = vld [vmem:[%s2 + $0x60] sm:$0xff]
    %v30 = vld [vmem:[%s2 + $0x68] sm:$0xff]
    %v31 = vld [vmem:[%s2 + $0x70] sm:$0xff]
    %v32 = vld [vmem:[%s2 + $0x78] sm:$0xff]
    %v33 = vmul.f32 %v15, %v15
    %vm34 = vcmask 1041408
    %v35 = vsel %vm34, %v33, 0.0
    %36 = vadd.xlane.f32.xlu0 %v35
    %v37 = vpop.xlane.xlu0 %36
    %v38 = vmax.f32 %v37, 1e-16
    %v39 = vrsqrt.pop %v38
    %v40 = vmul.f32 %v16, %v16
    %v41 = vsel %vm34, %v40, 0.0
    %42 = vadd.xlane.f32.xlu0 %v41
    %v43 = vpop.xlane.xlu0 %42
    %v44 = vmax.f32 %v43, 1e-16
    %v45 = vrsqrt.pop %v44
    %v46 = vmul.f32 %v17, %v17
    %v47 = vmul.f32 %v18, %v18
    %v48 = vmul.f32 %v19, %v19
    %v49 = vmul.f32 %v20, %v20
    %v50 = vmul.f32 %v21, %v21
    %v51 = vmul.f32 %v22, %v22
    %v52 = vmul.f32 %v23, %v23
    %v53 = vmul.f32 %v24, %v24
    %v54 = vmul.f32 %v25, %v25
    %v55 = vmul.f32 %v26, %v26
    %v56 = vmul.f32 %v27, %v27
    %v57 = vmul.f32 %v28, %v28
    %v58 = vmul.f32 %v29, %v29
    %v59 = vmul.f32 %v30, %v30
    %v60 = vmul.f32 %v31, %v31
    %v61 = vmul.f32 %v32, %v32
    %vm62 = vcmask 31744
    %v63 = vsel %vm62, %v46, 0.0
    %v64 = vsel %vm62, %v47, 0.0
    %v65 = vadd.f32 %v63, %v64
    %v66 = vsel %vm62, %v48, 0.0
    %v67 = vadd.f32 %v65, %v66
    %v68 = vsel %vm62, %v49, 0.0
    %v69 = vadd.f32 %v67, %v68
    %v70 = vsel %vm62, %v50, 0.0
    %v71 = vadd.f32 %v69, %v70
    %v72 = vsel %vm62, %v51, 0.0
    %v73 = vadd.f32 %v71, %v72
    %v74 = vsel %vm62, %v52, 0.0
    %v75 = vadd.f32 %v73, %v74
    %v76 = vsel %vm62, %v53, 0.0
    %v77 = vadd.f32 %v75, %v76
    %v78 = vsel %vm62, %v54, 0.0
    %v79 = vadd.f32 %v77, %v78
    %v80 = vsel %vm62, %v55, 0.0
    %v81 = vadd.f32 %v79, %v80
    %v82 = vsel %vm62, %v56, 0.0
    %v83 = vadd.f32 %v81, %v82
    %v84 = vsel %vm62, %v57, 0.0
    %v85 = vadd.f32 %v83, %v84
    %v86 = vsel %vm62, %v58, 0.0
    %v87 = vadd.f32 %v85, %v86
    %v88 = vsel %vm62, %v59, 0.0
    %v89 = vadd.f32 %v87, %v88
    %v90 = vsel %vm62, %v60, 0.0
    %v91 = vadd.f32 %v89, %v90
    %v92 = vsel %vm62, %v61, 0.0
    %v93 = vadd.f32 %v91, %v92
    %v94 = vrot.slane %v93, 4
    %v95 = vadd.f32 %v93, %v94
    %v96 = vrot.slane %v95, 2
    %v97 = vadd.f32 %v95, %v96
    %v98 = vrot.slane %v97, 1
    %v99 = vadd.f32 %v97, %v98
    %v100 = vmax.f32 %v99, 1e-16
    %v101 = vrsqrt.pop %v100
    %v102 = vmul.f32 %v15, %v16
    %v103 = vsel %vm34, %v102, 0.0
    %104 = vadd.xlane.f32.xlu0 %v103
    %v105 = vpop.xlane.xlu0 %104
    %106 = vmatprep.subr.mxu0 0.0
    %107 = vmatpush1.msra.mxu0 %v32
    %108 = vmatprep.subr.mxu0 0.0
    %109 = vmatpush1.msra.mxu0 %v31
    %110 = vmatprep.subr.mxu0 0.0
    %111 = vmatpush1.msra.mxu0 %v30
    %112 = vmatprep.subr.mxu0 0.0
    %113 = vmatpush1.msra.mxu0 %v29
    %114 = vmatprep.subr.mxu0 0.0
    %115 = vmatpush1.msra.mxu0 %v28
    %116 = vmatprep.subr.mxu0 0.0
    %117 = vmatpush1.msra.mxu0 %v27
    %118 = vmatprep.subr.mxu0 0.0
    %119 = vmatpush1.msra.mxu0 %v26
    %120 = vmatprep.subr.mxu0 0.0
    %121 = vmatpush1.msra.mxu0 %v25
    %122 = vmatprep.subr.mxu0 0.0
    %123 = vmatpush1.msra.mxu0 %v24
    %124 = vmatprep.subr.mxu0 0.0
    %125 = vmatpush1.msra.mxu0 %v23
    %126 = vmatprep.subr.mxu0 0.0
    %127 = vmatpush1.msra.mxu0 %v22
    %128 = vmatprep.subr.mxu0 0.0
    %129 = vmatpush1.msra.mxu0 %v21
    %130 = vmatprep.subr.mxu0 0.0
    %131 = vmatpush1.msra.mxu0 %v20
    %132 = vmatprep.subr.mxu0 0.0
    %133 = vmatpush1.msra.mxu0 %v19
    %134 = vmatprep.subr.mxu0 0.0
    %135 = vmatpush1.msra.mxu0 %v18
    %136 = vmatprep.subr.mxu0 0.0
    %137 = vmatpush1.msra.mxu0 %v17
    %138 = vmatprep.subr.mxu0 0.0
    %139 = vmatpush2.msra.mxu0 0.0
    %140 = vmatprep.subr.mxu0 0.0
    %141 = vmatpush2.msra.mxu0 0.0
    %142 = vmatprep.subr.mxu0 0.0
    %143 = vmatpush2.msra.mxu0 0.0
    %144 = vmatprep.subr.mxu0 0.0
    %145 = vmatpush2.msra.mxu0 0.0
    %146 = vmatprep.subr.mxu0 0.0
    %147 = vmatpush2.msra.mxu0 0.0
    %148 = vmatprep.subr.mxu0 0.0
    %149 = vmatpush2.msra.mxu0 0.0
    %150 = vmatprep.subr.mxu0 0.0
    %151 = vmatpush2.msra.mxu0 0.0
    %152 = vmatprep.subr.mxu0 0.0
    %153 = vmatpush2.msra.mxu0 0.0
    %154 = vmatprep.subr.mxu0 0.0
    %155 = vmatpush2.msra.mxu0 0.0
    %156 = vmatprep.subr.mxu0 0.0
    %157 = vmatpush2.msra.mxu0 0.0
    %158 = vmatprep.subr.mxu0 0.0
    %159 = vmatpush2.msra.mxu0 0.0
    %160 = vmatprep.subr.mxu0 0.0
    %161 = vmatpush2.msra.mxu0 0.0
    %162 = vmatprep.subr.mxu0 0.0
    %163 = vmatpush2.msra.mxu0 0.0
    %164 = vmatprep.subr.mxu0 0.0
    %165 = vmatpush2.msra.mxu0 0.0
    %166 = vmatprep.subr.mxu0 0.0
    %167 = vmatpush2.msra.mxu0 0.0
    %168 = vmatprep.subr.mxu0 0.0
    %169 = vmatpush2.msra.mxu0 0.0
    %170 = vmatprep.mubr.f32.mxu0 0.0
    %171 = vmatmul.mubr.f32.gmra.mxu0 %v15
    %v172 = vpop.f32.mrf.mxu0
    %v173 = vadd.f32 0.0, %v172
    %v174 = vpop.f32.mrf.mxu0
    %175 = vdwg.mxu0
    %v176 = vmul.f32 %v39, %v45
    %v177 = vmul.f32 %v105, %v176
    %v178 = vmul.f32 %v177, 20.0
    %v179 = vmul.f32 %v173, %v39
    %v180 = vmul.f32 %v179, %v101
    %v181 = vmul.f32 %v180, 20.0
    %vm182 = vcmask 25600
    %v183 = vsel %vm182, %v181, -inf
    %184 = vmax.xlane.f32.xlu0 %v183
    %v185 = vpop.xlane.xlu0 %184
    %v186 = vmax.f32 %v178, %v185
    %v187 = vsub.f32 %v178, %v186
    %v188 = vmul.f32 %v187, 1.442695
    %v189 = vpow.pop %v188
    %v190 = vsub.f32 %v181, %v186
    %v191 = vmul.f32 %v190, 1.442695
    %v192 = vpow.pop %v191
    %v193 = vsel %vm182, %v192, 0.0
    %194 = vadd.xlane.f32.xlu0 %v193
    %v195 = vpop.xlane.xlu0 %194
    %v196 = vadd.f32 %v189, %v195
    %v197 = vlog2.pop %v196
    %v198 = vmul.f32 %v197, 0.6931472
    %v199 = vadd.f32 %v198, %v186
    %v200 = vsub.f32 %v199, %v178
    %vm201 = vcmask 1024
    %v202 = vsel %vm201, %v200, 0.0
    %203 = vadd.xlane.f32.xlu0 %v202
    %v204 = vpop.xlane.xlu0 %203
    %v205 = vrot.slane %v204, 4
    %v206 = vadd.f32 %v204, %v205
    %v207 = vrot.slane %v206, 2
    %v208 = vadd.f32 %v206, %v207
    %v209 = vrot.slane %v208, 1
    %v210 = vadd.f32 %v208, %v209
    %s211 = vtos %v210
    %s212 = smul.f32 %s211, 0.5
    %s213 = scalar_lea.smem [#allocation2], 0
    %214 = sst [smem:[%s213]] %s212
    // Predicated region
    $region14: #{loss_fn.7} parent=1 // pred_check
      _
    $region15: #{loss_fn.7} parent=1 // pred_check_branch
      %216 = sbr.rel (0) target = $region17
    $region16: #{loss_fn.7} parent=1 // pred_region
      %s218 = ssub.s32 16, 16
      %219 = vsyncadd [#allocation3], %s218
      %222 = dma.smem_to_hbm [#allocation2], 16, %s3, [#allocation3]
    $region17: #{loss_fn.7} parent=1 // pred_fallthru
      _
    // Predicated region
    $region18: #{loss_fn.7} parent=1 // pred_check
      _
    $region19: #{loss_fn.7} parent=1 // pred_check_branch
      %224 = sbr.rel (0) target = $region21
    $region20: #{loss_fn.7} parent=1 // pred_region
      %225 = dma.done [#allocation3], 16
    $region21: #{loss_fn.7} parent=1 // pred_fallthru
      _
    %226 = sfence
    %227 = vsyncpa [#allocation3], 1

// kernel: loss_fn.6
$region0: #{loss_fn.6}
  #allocation0 [shape = 'u32[]', space=smem, size = 0x4, offset = 0x4, fixed_abs, tag = 'smem constant byte address 0x4 - core index']
  #allocation1 [shape = 'u32[144,128]{1,0:T(1,128)}', space=vmem, size = 0x12000, scoped, tag = 'internal scratch']
  #allocation2 [shape = 'f32[2,1,128]{2,1,0:T(1,128)}', space=vmem, size = 0x400, scoped, tag = 'scratch operand']
  %s0 = inlined_call_operand.vmem [shape: f32[4,256,128], index: 0, kind: input, shape index: {}]
  %s1 = inlined_call_operand.vmem [shape: f32[4,1,256], index: 1, kind: input, shape index: {}]
  %s2 = inlined_call_operand.vmem [shape: f32[4,1,1], index: 2, kind: input, shape index: {}]
  %s3 = inlined_call_operand.vmem [shape: f32[4,1,128], index: 3, kind: output, shape index: {}]
  %s4 = sld [smem:[#allocation0]]
  $region125: #{loss_fn.6} parent=0
    _
  %s6 = ssub.s32 1, %s4
  %s7 = scalar_select 0, %s6, %s4
  $region1: #{loss_fn.6} parent=0
    #allocation3 [shape = 'u8[262144]{0}', space=vmem, size = 0x40000, scoped, tag = 'input window, operand 0']
    #allocation4 [shape = 'u8[2048]{0}', space=vmem, size = 0x800, scoped, tag = 'input window, operand 1']
    loop: start=0, step=1, limit=6
    $region2: #{loss_fn.6} parent=1 // loop_pre_header
      _
    $region3: #{loss_fn.6} parent=1 // loop_header
      %s9 = sphi 0, %s13
      %p10 = scmp.ge.s32.totalorder %s9, 6
      %s16 = sphi 0, %s28
      %s17 = sphi 0, %s24
      %s18 = sphi 0, %s16
      %s19 = sphi 0, %s17
      %s20 = sphi 0, %s18
      %s21 = sphi 0, %s19
      %s33 = sphi 0, %s35
      %s36 = sphi 0, %s33
      %s37 = sphi 0, %s36
      %s53 = sphi 0, %s37
      %s61 = sphi 0, %s63
      %s64 = sphi 0, %s61
      %s65 = sphi 0, %s64
      %s81 = sphi 0, %s65
      %s87 = sphi 0, %s89
      %s90 = sphi 0, %s87
      %s91 = sphi 0, %s90
      %s107 = sphi 0, %s91
      %s113 = sphi 0, %s115
      %s116 = sphi 0, %s113
      %s117 = sphi 0, %s116
      %s133 = sphi 0, %s117
    $region4: #{loss_fn.6} parent=1 // loop_header_branch
      %12 = sbr.rel (%p10) target = $region8
    $region5: #{loss_fn.6} parent=1 // loop_body
      %s14 = ssub.s32 %s9, 1
      %s15 = ssub.s32 %s9, 2
      %s22 = sadd.s32 1, %s17
      %p23 = scmp.ge.s32.totalorder %s22, 2
      %s24 = scalar_select %p23, 0, %s22
      %s25 = sadd.s32 1, %s16
      %s26 = scalar_select %p23, %s25, %s16
      %p27 = scmp.ge.s32.totalorder %s26, 2
      %s28 = scalar_select %p27, 0, %s26
      %s29 = ssub.s32 %s16, %s28
      %s30 = ssub.s32 %s17, %s24
      %s31 = sor.u32 %s29, %s30
      %p32 = scmp.eq.s32.totalorder %s31, 0
      %s34 = sadd.s32 %s33, 1
      %s35 = scalar_select %p32, %s33, %s34
      %p38 = pneg %p32
      %p39 = scmp.eq.s32.totalorder %s9, 3
      %p40 = por %p38, %p39
      %p41 = scmp.ne.s32.totalorder %s33, %s36
      %p42 = scmp.eq.s32.totalorder %s9, 0
      %p43 = por %p41, %p42
      %p44 = scmp.ne.s32.totalorder %s33, %s36
      %p45 = scmp.eq.s32.totalorder %s14, 3
      %p46 = por %p44, %p45
      %p47 = scmp.ne.s32.totalorder %s36, %s37
      %p48 = scmp.eq.s32.totalorder %s14, 0
      %p49 = por %p47, %p48
      %p50 = scmp.ne.s32.totalorder %s36, %s37
      %p51 = scmp.eq.s32.totalorder %s15, 3
      %p52 = por %p50, %p51
      %p54 = scmp.ne.s32.totalorder %s37, %s53
      %p55 = scmp.eq.s32.totalorder %s15, 0
      %p56 = por %p54, %p55
      %s57 = ssub.s32 %s16, %s28
      %s58 = ssub.s32 %s17, %s24
      %s59 = sor.u32 %s57, %s58
      %p60 = scmp.eq.s32.totalorder %s59, 0
      %s62 = sadd.s32 %s61, 1
      %s63 = scalar_select %p60, %s61, %s62
      %p66 = pneg %p60
      %p67 = scmp.eq.s32.totalorder %s9, 3
      %p68 = por %p66, %p67
      %p69 = scmp.ne.s32.totalorder %s61, %s64
      %p70 = scmp.eq.s32.totalorder %s9, 0
      %p71 = por %p69, %p70
      %p72 = scmp.ne.s32.totalorder %s61, %s64
      %p73 = scmp.eq.s32.totalorder %s14, 3
      %p74 = por %p72, %p73
      %p75 = scmp.ne.s32.totalorder %s64, %s65
      %p76 = scmp.eq.s32.totalorder %s14, 0
      %p77 = por %p75, %p76
      %p78 = scmp.ne.s32.totalorder %s64, %s65
      %p79 = scmp.eq.s32.totalorder %s15, 3
      %p80 = por %p78, %p79
      %p82 = scmp.ne.s32.totalorder %s65, %s81
      %p83 = scmp.eq.s32.totalorder %s15, 0
      %p84 = por %p82, %p83
      %s85 = ssub.s32 %s16, %s28
      %p86 = scmp.eq.s32.totalorder %s85, 0
      %s88 = sadd.s32 %s87, 1
      %s89 = scalar_select %p86, %s87, %s88
      %p92 = pneg %p86
      %p93 = scmp.eq.s32.totalorder %s9, 3
      %p94 = por %p92, %p93
      %p95 = scmp.ne.s32.totalorder %s87, %s90
      %p96 = scmp.eq.s32.totalorder %s9, 0
      %p97 = por %p95, %p96
      %p98 = scmp.ne.s32.totalorder %s87, %s90
      %p99 = scmp.eq.s32.totalorder %s14, 3
      %p100 = por %p98, %p99
      %p101 = scmp.ne.s32.totalorder %s90, %s91
      %p102 = scmp.eq.s32.totalorder %s14, 0
      %p103 = por %p101, %p102
      %p104 = scmp.ne.s32.totalorder %s90, %s91
      %p105 = scmp.eq.s32.totalorder %s15, 3
      %p106 = por %p104, %p105
      %p108 = scmp.ne.s32.totalorder %s91, %s107
      %p109 = scmp.eq.s32.totalorder %s15, 0
      %p110 = por %p108, %p109
      %s111 = ssub.s32 %s16, %s28
      %p112 = scmp.eq.s32.totalorder %s111, 0
      %s114 = sadd.s32 %s113, 1
      %s115 = scalar_select %p112, %s113, %s114
      %p118 = pneg %p112
      %p119 = scmp.eq.s32.totalorder %s9, 3
      %p120 = por %p118, %p119
      %p121 = scmp.ne.s32.totalorder %s113, %s116
      %p122 = scmp.eq.s32.totalorder %s9, 0
      %p123 = por %p121, %p122
      %p124 = scmp.ne.s32.totalorder %s113, %s116
      %p125 = scmp.eq.s32.totalorder %s14, 3
      %p126 = por %p124, %p125
      %p127 = scmp.ne.s32.totalorder %s116, %s117
      %p128 = scmp.eq.s32.totalorder %s14, 0
      %p129 = por %p127, %p128
      %p130 = scmp.ne.s32.totalorder %s116, %s117
      %p131 = scmp.eq.s32.totalorder %s15, 3
      %p132 = por %p130, %p131
      %p134 = scmp.ne.s32.totalorder %s117, %s133
      %p135 = scmp.eq.s32.totalorder %s15, 0
      %p136 = por %p134, %p135
      %p137 = scmp.le.s32.totalorder 1, %s9
      %p138 = scmp.lt.s32.totalorder %s9, 5
      %p139 = pnand %p137, %p138
      %p140 = pneg %p139
      // Predicated region
      $region9: #{loss_fn.6} parent=5 // pred_check
        _
      $region10: #{loss_fn.6} parent=5 // pred_check_branch
        %142 = sbr.rel (%p139) target = $region12
      $region11: #{loss_fn.6} parent=5 // pred_region
        %s143 = ssub.s32 %s9, 1
      $region12: #{loss_fn.6} parent=5 // pred_fallthru
        _
      %p144 = scmp.lt.s32.totalorder %s9, 4
      // Predicated region
      $region13: #{loss_fn.6} parent=5 // pred_check
        %p145 = pneg %p144
      $region14: #{loss_fn.6} parent=5 // pred_check_branch
        %147 = sbr.rel (%p145) target = $region16
      $region15: #{loss_fn.6} parent=5 // pred_region
        // Predicated region
        $region17: #{loss_fn.6} parent=15 // pred_check
          %p148 = pneg %p43
        $region18: #{loss_fn.6} parent=15 // pred_check_branch
          %150 = sbr.rel (%p148) target = $region20
        $region19: #{loss_fn.6} parent=15 // pred_region
          %s151 = sand.u32 %s33, 1
          %s152 = sand.u32 %s33, 1
          %s153 = smul.addr %s152, 256
          %s154 = scalar_lea.vmem [#allocation3], %s153
          %s155 = smul.u32 2, %s16
          %s156 = smul.u32 16, %s17
          %s157 = smul.addr %s155, 32
          %s158 = sadd.s32 %s156, %s157
          %s159 = smul.addr %s158, 8
          %s160 = scalar_lea.vmem %s0, %s159
          // Predicated region
          $region21: #{loss_fn.6} parent=19 // pred_check
            _
          $region22: #{loss_fn.6} parent=19 // pred_check_branch
            %162 = sbr.rel (0) target = $region24
          $region23: #{loss_fn.6} parent=19 // pred_region
            // Predicated region
            $region25: #{loss_fn.6} parent=23 // pred_check
              _
            $region26: #{loss_fn.6} parent=23 // pred_check_branch
              %164 = sbr.rel (0) target = $region28
            $region27: #{loss_fn.6} parent=23 // pred_region
              // Predicated region
              $region40: #{loss_fn.6} parent=27 // pred_check
                _
              $region41: #{loss_fn.6} parent=27 // pred_check_branch
                %242 = sbr.rel (0) target = $region43
              $region42: #{loss_fn.6} parent=27 // pred_region
                loop: start=0, step=1, limit=1
                $region44: #{loss_fn.6} parent=42 // loop_pre_header
                  _
                $region45: #{loss_fn.6} parent=42 // loop_header
                  %s244 = sphi 0, %s248
                  %p245 = scmp.ge.s32.totalorder %s244, 1
                  %s249 = sphi %s160, %s160
                  %s250 = sphi %s154, %s154
                $region46: #{loss_fn.6} parent=42 // loop_header_branch
                  %247 = sbr.rel (%p245) target = $region50
                $region47: #{loss_fn.6} parent=42 // loop_body
                  %v251 = vld [vmem:[%s249] sm:$0xff]
                  %252 = vst [vmem:[%s250] sm:$0xff] %v251
                  %v253 = vld [vmem:[%s249 + $0x8] sm:$0xff]
                  %254 = vst [vmem:[%s250 + $0x8] sm:$0xff] %v253
                  %v255 = vld [vmem:[%s249 + $0x10] sm:$0xff]
                  %256 = vst [vmem:[%s250 + $0x10] sm:$0xff] %v255
                  %v257 = vld [vmem:[%s249 + $0x18] sm:$0xff]
                  %258 = vst [vmem:[%s250 + $0x18] sm:$0xff] %v257
                  %v259 = vld [vmem:[%s249 + $0x20] sm:$0xff]
                  %260 = vst [vmem:[%s250 + $0x20] sm:$0xff] %v259
                  %v261 = vld [vmem:[%s249 + $0x28] sm:$0xff]
                  %262 = vst [vmem:[%s250 + $0x28] sm:$0xff] %v261
                  %v263 = vld [vmem:[%s249 + $0x30] sm:$0xff]
                  %264 = vst [vmem:[%s250 + $0x30] sm:$0xff] %v263
                  %v265 = vld [vmem:[%s249 + $0x38] sm:$0xff]
                  %266 = vst [vmem:[%s250 + $0x38] sm:$0xff] %v265
                  %v267 = vld [vmem:[%s249 + $0x40] sm:$0xff]
                  %268 = vst [vmem:[%s250 + $0x40] sm:$0xff] %v267
                  %v269 = vld [vmem:[%s249 + $0x48] sm:$0xff]
                  %270 = vst [vmem:[%s250 + $0x48] sm:$0xff] %v269
                  %v271 = vld [vmem:[%s249 + $0x50] sm:$0xff]
                  %272 = vst [vmem:[%s250 + $0x50] sm:$0xff] %v271
                  %v273 = vld [vmem:[%s249 + $0x58] sm:$0xff]
                  %274 = vst [vmem:[%s250 + $0x58] sm:$0xff] %v273
                  %v275 = vld [vmem:[%s249 + $0x60] sm:$0xff]
                  %276 = vst [vmem:[%s250 + $0x60] sm:$0xff] %v275
                  %v277 = vld [vmem:[%s249 + $0x68] sm:$0xff]
                  %278 = vst [vmem:[%s250 + $0x68] sm:$0xff] %v277
                  %v279 = vld [vmem:[%s249 + $0x70] sm:$0xff]
                  %280 = vst [vmem:[%s250 + $0x70] sm:$0xff] %v279
                  %v281 = vld [vmem:[%s249 + $0x78] sm:$0xff]
                  %282 = vst [vmem:[%s250 + $0x78] sm:$0xff] %v281
                  %v283 = vld [vmem:[%s249 + $0x100] sm:$0xff]
                  %284 = vst [vmem:[%s250 + $0x80] sm:$0xff] %v283
                  %v285 = vld [vmem:[%s249 + $0x108] sm:$0xff]
                  %286 = vst [vmem:[%s250 + $0x88] sm:$0xff] %v285
                  %v287 = vld [vmem:[%s249 + $0x110] sm:$0xff]
                  %288 = vst [vmem:[%s250 + $0x90] sm:$0xff] %v287
                  %v289 = vld [vmem:[%s249 + $0x118] sm:$0xff]
                  %290 = vst [vmem:[%s250 + $0x98] sm:$0xff] %v289
                  %v291 = vld [vmem:[%s249 + $0x120] sm:$0xff]
                  %292 = vst [vmem:[%s250 + $0xa0] sm:$0xff] %v291
                  %v293 = vld [vmem:[%s249 + $0x128] sm:$0xff]
                  %294 = vst [vmem:[%s250 + $0xa8] sm:$0xff] %v293
                  %v295 = vld [vmem:[%s249 + $0x130] sm:$0xff]
                  %296 = vst [vmem:[%s250 + $0xb0] sm:$0xff] %v295
                  %v297 = vld [vmem:[%s249 + $0x138] sm:$0xff]
                  %298 = vst [vmem:[%s250 + $0xb8] sm:$0xff] %v297
                  %v299 = vld [vmem:[%s249 + $0x140] sm:$0xff]
                  %300 = vst [vmem:[%s250 + $0xc0] sm:$0xff] %v299
                  %v301 = vld [vmem:[%s249 + $0x148] sm:$0xff]
                  %302 = vst [vmem:[%s250 + $0xc8] sm:$0xff] %v301
                  %v303 = vld [vmem:[%s249 + $0x150] sm:$0xff]
                  %304 = vst [vmem:[%s250 + $0xd0] sm:$0xff] %v303
                  %v305 = vld [vmem:[%s249 + $0x158] sm:$0xff]
                  %306 = vst [vmem:[%s250 + $0xd8] sm:$0xff] %v305
                  %v307 = vld [vmem:[%s249 + $0x160] sm:$0xff]
                  %308 = vst [vmem:[%s250 + $0xe0] sm:$0xff] %v307
                  %v309 = vld [vmem:[%s249 + $0x168] sm:$0xff]
                  %310 = vst [vmem:[%s250 + $0xe8] sm:$0xff] %v309
                  %v311 = vld [vmem:[%s249 + $0x170] sm:$0xff]
                  %312 = vst [vmem:[%s250 + $0xf0] sm:$0xff] %v311
                  %v313 = vld [vmem:[%s249 + $0x178] sm:$0xff]
                  %314 = vst [vmem:[%s250 + $0xf8] sm:$0xff] %v313
                $region48: #{loss_fn.6} parent=42 // loop_footer
                  %s248 = sadd.s32 1, %s244
                $region49: #{loss_fn.6} parent=42 // loop_footer_branch
                  %243 = sbr.rel target = $region45
                $region50: #{loss_fn.6} parent=42 // loop_exit
                  _
              $region43: #{loss_fn.6} parent=27 // pred_fallthru
                _
              // Predicated region
              $region51: #{loss_fn.6} parent=27 // pred_check
                _
              $region52: #{loss_fn.6} parent=27 // pred_check_branch
                %316 = sbr.rel target = $region54
              $region53: #{loss_fn.6} parent=27 // pred_region
                _
              $region54: #{loss_fn.6} parent=27 // pred_fallthru
                _
            $region28: #{loss_fn.6} parent=23 // pred_fallthru
              _
            // Predicated region
            $region29: #{loss_fn.6} parent=23 // pred_check
              _
            $region30: #{loss_fn.6} parent=23 // pred_check_branch
              %166 = sbr.rel target = $region32
            $region31: #{loss_fn.6} parent=23 // pred_region
              %s168 = ssub.s32 256, 1
              loop: start=0, step=1, limit=1
              $region33: #{loss_fn.6} parent=31 // loop_pre_header
                _
              $region34: #{loss_fn.6} parent=31 // loop_header
                %s170 = sphi 0, %s174
                %p171 = scmp.ge.s32.totalorder %s170, 1
                %s175 = sphi %s160, %s160
                %s176 = sphi %s154, %s154
              $region35: #{loss_fn.6} parent=31 // loop_header_branch
                %173 = sbr.rel (%p171) target = $region39
              $region36: #{loss_fn.6} parent=31 // loop_body
                %v177 = vld [vmem:[%s175] sm:%s168]
                %178 = vst [vmem:[%s176] sm:%s168] %v177
                %v179 = vld [vmem:[%s175 + $0x8] sm:%s168]
                %180 = vst [vmem:[%s176 + $0x8] sm:%s168] %v179
                %v181 = vld [vmem:[%s175 + $0x10] sm:%s168]
                %182 = vst [vmem:[%s176 + $0x10] sm:%s168] %v181
                %v183 = vld [vmem:[%s175 + $0x18] sm:%s168]
                %184 = vst [vmem:[%s176 + $0x18] sm:%s168] %v183
                %v185 = vld [vmem:[%s175 + $0x20] sm:%s168]
                %186 = vst [vmem:[%s176 + $0x20] sm:%s168] %v185
                %v187 = vld [vmem:[%s175 + $0x28] sm:%s168]
                %188 = vst [vmem:[%s176 + $0x28] sm:%s168] %v187
                %v189 = vld [vmem:[%s175 + $0x30] sm:%s168]
                %190 = vst [vmem:[%s176 + $0x30] sm:%s168] %v189
                %v191 = vld [vmem:[%s175 + $0x38] sm:%s168]
                %192 = vst [vmem:[%s176 + $0x38] sm:%s168] %v191
                %v193 = vld [vmem:[%s175 + $0x40] sm:%s168]
                %194 = vst [vmem:[%s176 + $0x40] sm:%s168] %v193
                %v195 = vld [vmem:[%s175 + $0x48] sm:%s168]
                %196 = vst [vmem:[%s176 + $0x48] sm:%s168] %v195
                %v197 = vld [vmem:[%s175 + $0x50] sm:%s168]
                %198 = vst [vmem:[%s176 + $0x50] sm:%s168] %v197
                %v199 = vld [vmem:[%s175 + $0x58] sm:%s168]
                %200 = vst [vmem:[%s176 + $0x58] sm:%s168] %v199
                %v201 = vld [vmem:[%s175 + $0x60] sm:%s168]
                %202 = vst [vmem:[%s176 + $0x60] sm:%s168] %v201
                %v203 = vld [vmem:[%s175 + $0x68] sm:%s168]
                %204 = vst [vmem:[%s176 + $0x68] sm:%s168] %v203
                %v205 = vld [vmem:[%s175 + $0x70] sm:%s168]
                %206 = vst [vmem:[%s176 + $0x70] sm:%s168] %v205
                %v207 = vld [vmem:[%s175 + $0x78] sm:%s168]
                %208 = vst [vmem:[%s176 + $0x78] sm:%s168] %v207
                %v209 = vld [vmem:[%s175 + $0x100] sm:%s168]
                %210 = vst [vmem:[%s176 + $0x80] sm:%s168] %v209
                %v211 = vld [vmem:[%s175 + $0x108] sm:%s168]
                %212 = vst [vmem:[%s176 + $0x88] sm:%s168] %v211
                %v213 = vld [vmem:[%s175 + $0x110] sm:%s168]
                %214 = vst [vmem:[%s176 + $0x90] sm:%s168] %v213
                %v215 = vld [vmem:[%s175 + $0x118] sm:%s168]
                %216 = vst [vmem:[%s176 + $0x98] sm:%s168] %v215
                %v217 = vld [vmem:[%s175 + $0x120] sm:%s168]
                %218 = vst [vmem:[%s176 + $0xa0] sm:%s168] %v217
                %v219 = vld [vmem:[%s175 + $0x128] sm:%s168]
                %220 = vst [vmem:[%s176 + $0xa8] sm:%s168] %v219
                %v221 = vld [vmem:[%s175 + $0x130] sm:%s168]
                %222 = vst [vmem:[%s176 + $0xb0] sm:%s168] %v221
                %v223 = vld [vmem:[%s175 + $0x138] sm:%s168]
                %224 = vst [vmem:[%s176 + $0xb8] sm:%s168] %v223
                %v225 = vld [vmem:[%s175 + $0x140] sm:%s168]
                %226 = vst [vmem:[%s176 + $0xc0] sm:%s168] %v225
                %v227 = vld [vmem:[%s175 + $0x148] sm:%s168]
                %228 = vst [vmem:[%s176 + $0xc8] sm:%s168] %v227
                %v229 = vld [vmem:[%s175 + $0x150] sm:%s168]
                %230 = vst [vmem:[%s176 + $0xd0] sm:%s168] %v229
                %v231 = vld [vmem:[%s175 + $0x158] sm:%s168]
                %232 = vst [vmem:[%s176 + $0xd8] sm:%s168] %v231
                %v233 = vld [vmem:[%s175 + $0x160] sm:%s168]
                %234 = vst [vmem:[%s176 + $0xe0] sm:%s168] %v233
                %v235 = vld [vmem:[%s175 + $0x168] sm:%s168]
                %236 = vst [vmem:[%s176 + $0xe8] sm:%s168] %v235
                %v237 = vld [vmem:[%s175 + $0x170] sm:%s168]
                %238 = vst [vmem:[%s176 + $0xf0] sm:%s168] %v237
                %v239 = vld [vmem:[%s175 + $0x178] sm:%s168]
                %240 = vst [vmem:[%s176 + $0xf8] sm:%s168] %v239
              $region37: #{loss_fn.6} parent=31 // loop_footer
                %s174 = sadd.s32 1, %s170
              $region38: #{loss_fn.6} parent=31 // loop_footer_branch
                %169 = sbr.rel target = $region34
              $region39: #{loss_fn.6} parent=31 // loop_exit
                _
            $region32: #{loss_fn.6} parent=23 // pred_fallthru
              _
          $region24: #{loss_fn.6} parent=19 // pred_fallthru
            _
          %317 = vnop
        $region20: #{loss_fn.6} parent=15 // pred_fallthru
          _
        // Predicated region
        $region55: #{loss_fn.6} parent=15 // pred_check
          %p318 = pneg %p71
        $region56: #{loss_fn.6} parent=15 // pred_check_branch
          %320 = sbr.rel (%p318) target = $region58
        $region57: #{loss_fn.6} parent=15 // pred_region
          %s321 = sand.u32 %s61, 1
          %s322 = sand.u32 %s61, 1
          %s323 = smul.addr %s322, 2
          %s324 = scalar_lea.vmem [#allocation4], %s323
          %s325 = smul.u32 2, %s16
          %s326 = smul.addr %s325, 2
          %s327 = sadd.s32 %s17, %s326
          %s328 = scalar_lea.vmem %s1, %s327
          // Predicated region
          $region59: #{loss_fn.6} parent=57 // pred_check
            _
          $region60: #{loss_fn.6} parent=57 // pred_check_branch
            %330 = sbr.rel (0) target = $region62
          $region61: #{loss_fn.6} parent=57 // pred_region
            // Predicated region
            $region63: #{loss_fn.6} parent=61 // pred_check
              _
            $region64: #{loss_fn.6} parent=61 // pred_check_branch
              %332 = sbr.rel target = $region66
            $region65: #{loss_fn.6} parent=61 // pred_region
              // Predicated region
              $region78: #{loss_fn.6} parent=65 // pred_check
                _
              $region79: #{loss_fn.6} parent=65 // pred_check_branch
                %350 = sbr.rel (0) target = $region81
              $region80: #{loss_fn.6} parent=65 // pred_region
                %s352 = ssub.s32 2, 1
                loop: start=0, step=1, limit=1
                $region82: #{loss_fn.6} parent=80 // loop_pre_header
                  _
                $region83: #{loss_fn.6} parent=80 // loop_header
                  %s354 = sphi 0, %s358
                  %p355 = scmp.ge.s32.totalorder %s354, 1
                  %s359 = sphi %s328, %s328
                  %s360 = sphi %s324, %s324
                $region84: #{loss_fn.6} parent=80 // loop_header_branch
                  %357 = sbr.rel (%p355) target = $region88
                $region85: #{loss_fn.6} parent=80 // loop_body
                  %v361 = vld [vmem:[%s359] sm:%s352]
                  %362 = vst [vmem:[%s360] sm:%s352] %v361
                  %v363 = vld [vmem:[%s359 + $0x2] sm:%s352]
                  %364 = vst [vmem:[%s360 + $0x1] sm:%s352] %v363
                $region86: #{loss_fn.6} parent=80 // loop_footer
                  %s358 = sadd.s32 1, %s354
                $region87: #{loss_fn.6} parent=80 // loop_footer_branch
                  %353 = sbr.rel target = $region83
                $region88: #{loss_fn.6} parent=80 // loop_exit
                  _
              $region81: #{loss_fn.6} parent=65 // pred_fallthru
                _
            $region66: #{loss_fn.6} parent=61 // pred_fallthru
              _
            // Predicated region
            $region67: #{loss_fn.6} parent=61 // pred_check
              _
            $region68: #{loss_fn.6} parent=61 // pred_check_branch
              %334 = sbr.rel (0) target = $region70
            $region69: #{loss_fn.6} parent=61 // pred_region
              %s336 = ssub.s32 2, 1
              loop: start=0, step=1, limit=1
              $region71: #{loss_fn.6} parent=69 // loop_pre_header
                _
              $region72: #{loss_fn.6} parent=69 // loop_header
                %s338 = sphi 0, %s342
                %p339 = scmp.ge.s32.totalorder %s338, 1
                %s343 = sphi %s328, %s328
                %s344 = sphi %s324, %s324
              $region73: #{loss_fn.6} parent=69 // loop_header_branch
                %341 = sbr.rel (%p339) target = $region77
              $region74: #{loss_fn.6} parent=69 // loop_body
                %v345 = vld [vmem:[%s343] sm:%s336]
                %346 = vst [vmem:[%s344] sm:%s336] %v345
                %v347 = vld [vmem:[%s343 + $0x2] sm:%s336]
                %348 = vst [vmem:[%s344 + $0x1] sm:%s336] %v347
              $region75: #{loss_fn.6} parent=69 // loop_footer
                %s342 = sadd.s32 1, %s338
              $region76: #{loss_fn.6} parent=69 // loop_footer_branch
                %337 = sbr.rel target = $region72
              $region77: #{loss_fn.6} parent=69 // loop_exit
                _
            $region70: #{loss_fn.6} parent=61 // pred_fallthru
              _
          $region62: #{loss_fn.6} parent=57 // pred_fallthru
            _
          %365 = vnop
        $region58: #{loss_fn.6} parent=15 // pred_fallthru
          _
        // Predicated region
        $region89: #{loss_fn.6} parent=15 // pred_check
          %p366 = pneg %p97
        $region90: #{loss_fn.6} parent=15 // pred_check_branch
          %368 = sbr.rel (%p366) target = $region92
        $region91: #{loss_fn.6} parent=15 // pred_region
          %s369 = smul.u32 2, %s16
          %p370 = scmp.lt.s32.totalorder %s369, 3
          %s371 = scalar_select %p370, %s369, 3
          %s372 = scalar_lea.vmem %s2, %s371
          %s373 = smul.u32 2, %s16
        $region92: #{loss_fn.6} parent=15 // pred_fallthru
          _
      $region16: #{loss_fn.6} parent=5 // pred_fallthru
        _
      %p374 = scmp.le.s32.totalorder 1, %s9
      %p375 = scmp.lt.s32.totalorder %s9, 5
      %p376 = pnand %p374, %p375
      %p377 = pneg %p376
      // Predicated region
      $region93: #{loss_fn.6} parent=5 // pred_check
        _
      $region94: #{loss_fn.6} parent=5 // pred_check_branch
        %379 = sbr.rel (%p376) target = $region96
      $region95: #{loss_fn.6} parent=5 // pred_region
        %s380 = ssub.s32 %s9, 1
        %s381 = sand.u32 %s36, 1
        %s382 = sand.u32 %s36, 1
        %s383 = smul.addr %s382, 256
        %s384 = scalar_lea.vmem [#allocation3], %s383
        // Predicated region
        $region97: #{loss_fn.6} parent=95 // pred_check
          %p385 = pneg %p49
        $region98: #{loss_fn.6} parent=95 // pred_check_branch
          %387 = sbr.rel (%p385) target = $region100
        $region99: #{loss_fn.6} parent=95 // pred_region
          _
        $region100: #{loss_fn.6} parent=95 // pred_fallthru
          _
        %s388 = sand.u32 %s64, 1
        %s389 = sand.u32 %s64, 1
        %s390 = smul.addr %s389, 2
        %s391 = scalar_lea.vmem [#allocation4], %s390
        // Predicated region
        $region101: #{loss_fn.6} parent=95 // pred_check
          %p392 = pneg %p77
        $region102: #{loss_fn.6} parent=95 // pred_check_branch
          %394 = sbr.rel (%p392) target = $region104
        $region103: #{loss_fn.6} parent=95 // pred_region
          _
        $region104: #{loss_fn.6} parent=95 // pred_fallthru
          _
        %s395 = sand.u32 %s36, 1
        %s396 = sand.u32 %s36, 1
        %s397 = smul.addr %s396, 256
        %s398 = scalar_lea.vmem [#allocation3], %s397
        %p399 = pneg %p49
        %p400 = pneg %p46
        %s401 = sand.u32 %s64, 1
        %s402 = sand.u32 %s64, 1
        %s403 = smul.addr %s402, 2
        %s404 = scalar_lea.vmem [#allocation4], %s403
        %p405 = pneg %p77
        %p406 = pneg %p74
        %s407 = smul.u32 2, %s18
        %p408 = scmp.lt.s32.totalorder %s407, 3
        %s409 = scalar_select %p408, %s407, 3
        %s410 = scalar_lea.vmem %s2, %s409
        %p411 = pneg %p103
        %p412 = pneg %p100
        %p413 = pneg %p129
        %p414 = pneg %p126
        %s415 = smul.u32 2, %s18
        %p416 = scmp.lt.s32.totalorder %s415, 3
        %s417 = scalar_select %p416, %s415, 3
        %s418 = scalar_lea.vmem %s3, %s417
        %s419 = smul.u32 2, %s18
        %s420 = smul.u32 16, %s19
        %s421 = smul.u32 2, %s18
        %s422 = smul.u32 2, %s18
        %p423 = scmp.lt.s32.totalorder %s422, 3
        %s424 = scalar_select %p423, %s422, 3
        %s425 = scalar_lea.vmem %s2, %s424
        %s426 = smul.u32 2, %s18
        %s427 = smul.u32 2, %s18
        %p428 = scmp.lt.s32.totalorder %s427, 3
        %s429 = scalar_select %p428, %s427, 3
        %s430 = scalar_lea.vmem %s3, %s429
        %s431 = smul.u32 2, %s18
        %p432 = scmp.eq.s32.totalorder %s19, 0
        // Predicated region
        $region105: #{loss_fn.6} parent=95 // pred_check
          %p433 = pneg %p432
        $region106: #{loss_fn.6} parent=95 // pred_check_branch
          %435 = sbr.rel (%p433) target = $region108
        $region107: #{loss_fn.6} parent=95 // pred_region
          %436 = vst [vmem:[#allocation2] sm:$0x1] 0.0
          %437 = vst [vmem:[#allocation2 + $0x1] sm:$0x1] 0.0
        $region108: #{loss_fn.6} parent=95 // pred_fallthru
          _
        %v438 = vld [vmem:[%s391] sm:$0x1]
        %v439 = vld [vmem:[%s391 + $0x1] sm:$0x1]
        %v440 = vld [vmem:[%s384] sm:$0xff]
        %v441 = vld [vmem:[%s384 + $0x8] sm:$0xff]
        %v442 = vld [vmem:[%s384 + $0x10] sm:$0xff]
        %v443 = vld [vmem:[%s384 + $0x18] sm:$0xff]
        %v444 = vld [vmem:[%s384 + $0x20] sm:$0xff]
        %v445 = vld [vmem:[%s384 + $0x28] sm:$0xff]
        %v446 = vld [vmem:[%s384 + $0x30] sm:$0xff]
        %v447 = vld [vmem:[%s384 + $0x38] sm:$0xff]
        %v448 = vld [vmem:[%s384 + $0x40] sm:$0xff]
        %v449 = vld [vmem:[%s384 + $0x48] sm:$0xff]
        %v450 = vld [vmem:[%s384 + $0x50] sm:$0xff]
        %v451 = vld [vmem:[%s384 + $0x58] sm:$0xff]
        %v452 = vld [vmem:[%s384 + $0x60] sm:$0xff]
        %v453 = vld [vmem:[%s384 + $0x68] sm:$0xff]
        %v454 = vld [vmem:[%s384 + $0x70] sm:$0xff]
        %v455 = vld [vmem:[%s384 + $0x78] sm:$0xff]
        %v456 = vld [vmem:[%s384 + $0x80] sm:$0xff]
        %v457 = vld [vmem:[%s384 + $0x88] sm:$0xff]
        %v458 = vld [vmem:[%s384 + $0x90] sm:$0xff]
        %v459 = vld [vmem:[%s384 + $0x98] sm:$0xff]
        %v460 = vld [vmem:[%s384 + $0xa0] sm:$0xff]
        %v461 = vld [vmem:[%s384 + $0xa8] sm:$0xff]
        %v462 = vld [vmem:[%s384 + $0xb0] sm:$0xff]
        %v463 = vld [vmem:[%s384 + $0xb8] sm:$0xff]
        %v464 = vld [vmem:[%s384 + $0xc0] sm:$0xff]
        %v465 = vld [vmem:[%s384 + $0xc8] sm:$0xff]
        %v466 = vld [vmem:[%s384 + $0xd0] sm:$0xff]
        %v467 = vld [vmem:[%s384 + $0xd8] sm:$0xff]
        %v468 = vld [vmem:[%s384 + $0xe0] sm:$0xff]
        %v469 = vld [vmem:[%s384 + $0xe8] sm:$0xff]
        %v470 = vld [vmem:[%s384 + $0xf0] sm:$0xff]
        %v471 = vld [vmem:[%s384 + $0xf8] sm:$0xff]
        %v472 = vld [vmem:[#allocation2] sm:$0x1]
        %v473 = vld [vmem:[#allocation2 + $0x1] sm:$0x1]
        %474 = vmatprep.subr.mxu0 0.0
        %475 = vmatpush1.msra.mxu0 %v455
        %476 = vmatprep.subr.mxu0 0.0
        %477 = vmatpush1.msra.mxu0 %v454
        %478 = vmatprep.subr.mxu0 0.0
        %479 = vmatpush1.msra.mxu0 %v453
        %480 = vmatprep.subr.mxu0 0.0
        %481 = vmatpush1.msra.mxu0 %v452
        %482 = vmatprep.subr.mxu0 0.0
        %483 = vmatpush1.msra.mxu0 %v451
        %484 = vmatprep.subr.mxu0 0.0
        %485 = vmatpush1.msra.mxu0 %v450
        %486 = vmatprep.subr.mxu0 0.0
        %487 = vmatpush1.msra.mxu0 %v449
        %488 = vmatprep.subr.mxu0 0.0
        %489 = vmatpush1.msra.mxu0 %v448
        %490 = vmatprep.subr.mxu0 0.0
        %491 = vmatpush1.msra.mxu0 %v447
        %492 = vmatprep.subr.mxu0 0.0
        %493 = vmatpush1.msra.mxu0 %v446
        %494 = vmatprep.subr.mxu0 0.0
        %495 = vmatpush1.msra.mxu0 %v445
        %496 = vmatprep.subr.mxu0 0.0
        %497 = vmatpush1.msra.mxu0 %v444
        %498 = vmatprep.subr.mxu0 0.0
        %499 = vmatpush1.msra.mxu0 %v443
        %500 = vmatprep.subr.mxu0 0.0
        %501 = vmatpush1.msra.mxu0 %v442
        %502 = vmatprep.subr.mxu0 0.0
        %503 = vmatpush1.msra.mxu0 %v441
        %504 = vmatprep.subr.mxu0 0.0
        %505 = vmatpush1.msra.mxu0 %v440
        %506 = vmatprep.subr.mxu0 0.0
        %507 = vmatpush2.msra.mxu0 0.0
        %508 = vmatprep.subr.mxu0 0.0
        %509 = vmatpush2.msra.mxu0 0.0
        %510 = vmatprep.subr.mxu0 0.0
        %511 = vmatpush2.msra.mxu0 0.0
        %512 = vmatprep.subr.mxu0 0.0
        %513 = vmatpush2.msra.mxu0 0.0
        %514 = vmatprep.subr.mxu0 0.0
        %515 = vmatpush2.msra.mxu0 0.0
        %516 = vmatprep.subr.mxu0 0.0
        %517 = vmatpush2.msra.mxu0 0.0
        %518 = vmatprep.subr.mxu0 0.0
        %519 = vmatpush2.msra.mxu0 0.0
        %520 = vmatprep.subr.mxu0 0.0
        %521 = vmatpush2.msra.mxu0 0.0
        %522 = vmatprep.subr.mxu0 0.0
        %523 = vmatpush2.msra.mxu0 0.0
        %524 = vmatprep.subr.mxu0 0.0
        %525 = vmatpush2.msra.mxu0 0.0
        %526 = vmatprep.subr.mxu0 0.0
        %527 = vmatpush2.msra.mxu0 0.0
        %528 = vmatprep.subr.mxu0 0.0
        %529 = vmatpush2.msra.mxu0 0.0
        %530 = vmatprep.subr.mxu0 0.0
        %531 = vmatpush2.msra.mxu0 0.0
        %532 = vmatprep.subr.mxu0 0.0
        %533 = vmatpush2.msra.mxu0 0.0
        %534 = vmatprep.subr.mxu0 0.0
        %535 = vmatpush2.msra.mxu0 0.0
        %536 = vmatprep.subr.mxu0 0.0
        %537 = vmatpush2.msra.mxu0 0.0
        %538 = vmatprep.mubr.f32.mxu0 0.0
        %539 = vmatmul.mubr.f32.gmra.mxu0 %v438
        %v540 = vpop.f32.mrf.mxu0
        %v541 = vadd.f32 0.0, %v540
        %v542 = vpop.f32.mrf.mxu0
        %543 = vdwg.mxu0
        %544 = vmatprep.subr.mxu0 0.0
        %545 = vmatpush1.msra.mxu0 %v471
        %546 = vmatprep.subr.mxu0 0.0
        %547 = vmatpush1.msra.mxu0 %v470
        %548 = vmatprep.subr.mxu0 0.0
        %549 = vmatpush1.msra.mxu0 %v469
        %550 = vmatprep.subr.mxu0 0.0
        %551 = vmatpush1.msra.mxu0 %v468
        %552 = vmatprep.subr.mxu0 0.0
        %553 = vmatpush1.msra.mxu0 %v467
        %554 = vmatprep.subr.mxu0 0.0
        %555 = vmatpush1.msra.mxu0 %v466
        %556 = vmatprep.subr.mxu0 0.0
        %557 = vmatpush1.msra.mxu0 %v465
        %558 = vmatprep.subr.mxu0 0.0
        %559 = vmatpush1.msra.mxu0 %v464
        %560 = vmatprep.subr.mxu0 0.0
        %561 = vmatpush1.msra.mxu0 %v463
        %562 = vmatprep.subr.mxu0 0.0
        %563 = vmatpush1.msra.mxu0 %v462
        %564 = vmatprep.subr.mxu0 0.0
        %565 = vmatpush1.msra.mxu0 %v461
        %566 = vmatprep.subr.mxu0 0.0
        %567 = vmatpush1.msra.mxu0 %v460
        %568 = vmatprep.subr.mxu0 0.0
        %569 = vmatpush1.msra.mxu0 %v459
        %570 = vmatprep.subr.mxu0 0.0
        %571 = vmatpush1.msra.mxu0 %v458
        %572 = vmatprep.subr.mxu0 0.0
        %573 = vmatpush1.msra.mxu0 %v457
        %574 = vmatprep.subr.mxu0 0.0
        %575 = vmatpush1.msra.mxu0 %v456
        %576 = vmatprep.subr.mxu0 0.0
        %577 = vmatpush2.msra.mxu0 0.0
        %578 = vmatprep.subr.mxu0 0.0
        %579 = vmatpush2.msra.mxu0 0.0
        %580 = vmatprep.subr.mxu0 0.0
        %581 = vmatpush2.msra.mxu0 0.0
        %582 = vmatprep.subr.mxu0 0.0
        %583 = vmatpush2.msra.mxu0 0.0
        %584 = vmatprep.subr.mxu0 0.0
        %585 = vmatpush2.msra.mxu0 0.0
        %586 = vmatprep.subr.mxu0 0.0
        %587 = vmatpush2.msra.mxu0 0.0
        %588 = vmatprep.subr.mxu0 0.0
        %589 = vmatpush2.msra.mxu0 0.0
        %590 = vmatprep.subr.mxu0 0.0
        %591 = vmatpush2.msra.mxu0 0.0
        %592 = vmatprep.subr.mxu0 0.0
        %593 = vmatpush2.msra.mxu0 0.0
        %594 = vmatprep.subr.mxu0 0.0
        %595 = vmatpush2.msra.mxu0 0.0
        %596 = vmatprep.subr.mxu0 0.0
        %597 = vmatpush2.msra.mxu0 0.0
        %598 = vmatprep.subr.mxu0 0.0
        %599 = vmatpush2.msra.mxu0 0.0
        %600 = vmatprep.subr.mxu0 0.0
        %601 = vmatpush2.msra.mxu0 0.0
        %602 = vmatprep.subr.mxu0 0.0
        %603 = vmatpush2.msra.mxu0 0.0
        %604 = vmatprep.subr.mxu0 0.0
        %605 = vmatpush2.msra.mxu0 0.0
        %606 = vmatprep.subr.mxu0 0.0
        %607 = vmatpush2.msra.mxu0 0.0
        %608 = vmatprep.mubr.f32.mxu0 0.0
        %609 = vmatmul.mubr.f32.gmra.mxu0 %v439
        %v610 = vpop.f32.mrf.mxu0
        %v611 = vadd.f32 0.0, %v610
        %v612 = vpop.f32.mrf.mxu0
        %613 = vdwg.mxu0
        %v614 = vadd.f32 %v472, %v541
        %v615 = vadd.f32 %v473, %v611
        %616 = vst [vmem:[#allocation2] sm:$0x1] %v614
        %617 = vst [vmem:[#allocation2 + $0x1] sm:$0x1] %v615
        %p618 = scmp.eq.s32.totalorder %s19, 1
        // Predicated region
        $region109: #{loss_fn.6} parent=95 // pred_check
          %p619 = pneg %p618
        $region110: #{loss_fn.6} parent=95 // pred_check_branch
          %621 = sbr.rel (%p619) target = $region112
        $region111: #{loss_fn.6} parent=95 // pred_region
          %v622 = vld [vmem:[#allocation2] sm:$0x1]
          %v623 = vld [vmem:[#allocation2 + $0x1] sm:$0x1]
          %v624 = vld [vmem:[%s425] sm:$0x1]
          %v625 = vld [vmem:[%s425 + $0x1] sm:$0x1]
          %627 = vset.pattern.permute.xlu0 0
          %628 = vperm.xlu0 %627, %v624
          %v629 = vpop.permute.xlu0 %628
          %v631 = vlaneseq
          %v632 = vshrl.u32 %v631, 7
          %v633 = vsub.s32 0, %v632
          %v634 = vrot.slane %v629, %v633
          %636 = vset.pattern.permute.xlu0 0
          %637 = vperm.xlu0 %636, %v625
          %v638 = vpop.permute.xlu0 %637
          %v640 = vlaneseq
          %v641 = vshrl.u32 %v640, 7
          %v642 = vsub.s32 0, %v641
          %v643 = vrot.slane %v638, %v642
          %v644 = vmul.f32 %v622, %v634
          %v645 = vmul.f32 %v623, %v643
          %646 = vst [vmem:[%s430] sm:$0x1] %v644
          %647 = vst [vmem:[%s430 + $0x1] sm:$0x1] %v645
        $region112: #{loss_fn.6} parent=95 // pred_fallthru
          _
        %s648 = smul.u32 2, %s18
        %p649 = scmp.lt.s32.totalorder %s648, 3
        %s650 = scalar_select %p649, %s648, 3
        %s651 = scalar_lea.vmem %s3, %s650
        // Predicated region
        $region113: #{loss_fn.6} parent=95 // pred_check
          %p652 = pneg %p126
        $region114: #{loss_fn.6} parent=95 // pred_check_branch
          %654 = sbr.rel (%p652) target = $region116
        $region115: #{loss_fn.6} parent=95 // pred_region
          %s655 = smul.u32 2, %s18
        $region116: #{loss_fn.6} parent=95 // pred_fallthru
          _
      $region96: #{loss_fn.6} parent=5 // pred_fallthru
        _
      %p656 = scmp.le.s32.totalorder 2, %s9
      // Predicated region
      $region117: #{loss_fn.6} parent=5 // pred_check
        %p657 = pneg %p656
      $region118: #{loss_fn.6} parent=5 // pred_check_branch
        %659 = sbr.rel (%p657) target = $region120
      $region119: #{loss_fn.6} parent=5 // pred_region
        %s660 = ssub.s32 %s9, 2
        // Predicated region
        $region121: #{loss_fn.6} parent=119 // pred_check
          %p661 = pneg %p132
        $region122: #{loss_fn.6} parent=119 // pred_check_branch
          %663 = sbr.rel (%p661) target = $region124
        $region123: #{loss_fn.6} parent=119 // pred_region
          %s664 = smul.u32 2, %s20
          %p665 = scmp.lt.s32.totalorder %s664, 3
          %s666 = scalar_select %p665, %s664, 3
          %s667 = scalar_lea.vmem %s3, %s666
        $region124: #{loss_fn.6} parent=119 // pred_fallthru
          _
      $region120: #{loss_fn.6} parent=5 // pred_fallthru
        _
    $region6: #{loss_fn.6} parent=1 // loop_footer
      %s13 = sadd.s32 1, %s9
    $region7: #{loss_fn.6} parent=1 // loop_footer_branch
      %8 = sbr.rel target = $region3
    $region8: #{loss_fn.6} parent=1 // loop_exit
      _

</llo_original>
